<compile_context>
chip_gen: v7x
topology: tpu7x:2x2x1
jax: 0.10.0
libtpu: 0.0.40
codegen_flags: <defaults>
</compile_context>

<pallas_src>
import functools

import jax
import jax.numpy as jnp
from jax.experimental import pallas as pl
from jax.experimental.pallas import tpu as pltpu


def _round_up(n, m):
    return (n + m - 1) // m * m


def _make_gru_kernel(Tc, Hp, mxu_dtype):
    """Kernel over one (batch-chunk, time-chunk) grid cell."""

    def kernel(gx_ref, h0_ref, wzr_ref, wc_ref, hall_ref, h_scr):
        # New batch chunk -> (re)load the initial hidden state.
        @pl.when(pl.program_id(1) == 0)
        def _():
            h_scr[...] = h0_ref[...]

        wzr = wzr_ref[...]          # (Hp, 2Hp)   fused [Wz_h | Wr_h]
        wc = wc_ref[...]            # (Hp, Hp)    candidate hidden weights

        def step(i, h):
            # Pre-activations from the hoisted x-side GEMM (+ biases), f32.
            g = gx_ref[i]                                     # (Bc, 3Hp)
            zr = jnp.dot(h.astype(mxu_dtype), wzr,
                         preferred_element_type=jnp.float32)  # (Bc, 2Hp)
            zt = jax.nn.sigmoid(zr[:, :Hp] + g[:, :Hp])
            rt = jax.nn.sigmoid(zr[:, Hp:] + g[:, Hp:2 * Hp])
            cand = jnp.tanh(
                jnp.dot((rt * h).astype(mxu_dtype), wc,
                        preferred_element_type=jnp.float32)
                + g[:, 2 * Hp:])
            h_new = (1.0 - zt) * h + zt * cand                # f32 gate math
            hall_ref[i] = h_new
            return h_new

        h_scr[...] = jax.lax.fori_loop(0, Tc, step, h_scr[...], unroll=True)

    return kernel


@functools.partial(jax.jit, static_argnames=("mxu_dtype", "time_block"))
def gru_forward(x, h0, params, *, mxu_dtype=jnp.bfloat16, time_block=8):
    """GRU recurrence. x: (T,B,I), h0: (B,H) -> (hAll (T,B,H), h_T (B,H))."""
    T, B, I = x.shape
    H = h0.shape[1]
    wzh, wzx, bz, wrh, wrx, br, wh, wx, bw = params
    f32 = jnp.float32

    # ---- padded / chunked geometry -------------------------------------
    Hp = _round_up(H, 128)                    # lane-dense hidden width
    Tc = int(time_block)
    Tp = _round_up(T, Tc)
    Bp8 = _round_up(B, 8)
    n_bchunks = 2 if Bp8 >= 16 else 1         # batch-parallel axis (v7x 2 TCs)
    Bc = _round_up(max(Bp8 // n_bchunks, 8), 8)
    Bp = Bc * n_bchunks
    n_tchunks = Tp // Tc

    # ---- fuse + pad weights --------------------------------------------
    def place(w):                              # (rows, H) -> (rows, Hp)
        return jnp.pad(w, ((0, 0), (0, Hp - H)))

    wzr_h = jnp.concatenate([place(wzh), place(wrh)], axis=1)      # (H, 2Hp)
    wzr_h = jnp.pad(wzr_h, ((0, Hp - H), (0, 0)))                  # (Hp, 2Hp)
    wc_h = jnp.pad(wh, ((0, Hp - H), (0, Hp - H)))                 # (Hp, Hp)

    wx_all = jnp.concatenate([place(wzx), place(wrx), place(wx)], axis=1)  # (I, 3Hp)
    pb = lambda b: jnp.pad(b, (0, Hp - H))
    b_all = jnp.concatenate([pb(bz), pb(br), pb(bw)])              # (3Hp,)

    # ---- hoisted x-side GEMM (all timesteps at once, full MXU util) ----
    gx = jnp.dot(x.reshape(T * B, I).astype(mxu_dtype),
                 wx_all.astype(mxu_dtype),
                 preferred_element_type=f32) + b_all
    gx = gx.reshape(T, B, 3 * Hp)
    gx = jnp.pad(gx, ((0, Tp - T), (0, Bp - B), (0, 0)))           # (Tp, Bp, 3Hp)
    h0p = jnp.pad(h0.astype(f32), ((0, Bp - B), (0, Hp - H)))      # (Bp, Hp)

    wzr_h = wzr_h.astype(mxu_dtype)
    wc_h = wc_h.astype(mxu_dtype)

    # ---- explicit VMEM budget (v7x has only 64 MiB physical) -----------
    wbytes = jnp.dtype(mxu_dtype).itemsize
    est = (2 * Tc * Bc * 3 * Hp * 4        # gx blocks (double-buffered)
           + 2 * Bc * Hp * 4               # h0 block
           + 2 * Hp * 2 * Hp * wbytes      # fused z|r hidden weights
           + 2 * Hp * Hp * wbytes          # candidate hidden weights
           + 2 * Tc * Bc * Hp * 4          # hAll output blocks
           + Bc * Hp * 4)                  # h scratch
    vmem_limit = int(max(32 * 1024 * 1024, min(2 * est, 64 * 1024 * 1024)))

    kernel = _make_gru_kernel(Tc, Hp, mxu_dtype)

    hall = pl.pallas_call(
        kernel,
        out_shape=jax.ShapeDtypeStruct((Tp, Bp, Hp), f32),
        grid_spec=pltpu.PrefetchScalarGridSpec(
            num_scalar_prefetch=0,
            grid=(n_bchunks, n_tchunks),
            in_specs=[
                pl.BlockSpec((Tc, Bc, 3 * Hp), lambda b, t: (t, b, 0)),  # gx chunk
                pl.BlockSpec((Bc, Hp), lambda b, t: (b, 0)),             # h0 chunk
                pl.BlockSpec((Hp, 2 * Hp), lambda b, t: (0, 0)),         # W_zr (h)
                pl.BlockSpec((Hp, Hp), lambda b, t: (0, 0)),             # W_c  (h)
            ],
            out_specs=pl.BlockSpec((Tc, Bc, Hp), lambda b, t: (t, b, 0)),
            scratch_shapes=[pltpu.VMEM((Bc, Hp), f32)],
        ),
        compiler_params=pltpu.CompilerParams(
            dimension_semantics=("parallel", "arbitrary"),  # batch || , time seq
            vmem_limit_bytes=vmem_limit),
    )(gx, h0p, wzr_h, wc_h)

    h_all = hall[:T, :B, :H]
    return h_all, h_all[-1]


def init_params(key, input_size, hidden_size):
    """PyTorch nn.Linear-style uniform init; returns per-gate split matrices."""
    fan_in = input_size + hidden_size
    bound = 1.0 / jnp.sqrt(jnp.float32(fan_in))
    ks = jax.random.split(key, 6)

    def linear(kw, kb):
        w = jax.random.uniform(kw, (hidden_size, fan_in), jnp.float32, -bound, bound)
        b = jax.random.uniform(kb, (hidden_size,), jnp.float32, -bound, bound)
        return w, b

    Wz, bz = linear(ks[0], ks[1])
    Wr, br = linear(ks[2], ks[3])
    W, bw = linear(ks[4], ks[5])

    # gate = cat((h, x), dim=1)  =>  first `hidden_size` columns act on h.
    def split(w):
        return w[:, :hidden_size].T, w[:, hidden_size:].T  # (H,H), (I,H)

    wzh, wzx = split(Wz)
    wrh, wrx = split(Wr)
    wh, wx = split(W)
    return (wzh, wzx, bz, wrh, wrx, br, wh, wx, bw)


def gru_reference(x, h0, params):
    """Pure-JAX reference matching the PyTorch one_step/forward semantics."""
    wzh, wzx, bz, wrh, wrx, br, wh, wx, bw = params
    h = h0
    hs = []
    for t in range(x.shape[0]):
        xt = x[t]
        zt = jax.nn.sigmoid(h @ wzh + xt @ wzx + bz)
        rt = jax.nn.sigmoid(h @ wrh + xt @ wrx + br)
        cand = jnp.tanh((rt * h) @ wh + xt @ wx + bw)
        h = (1.0 - zt) * h + zt * cand
        hs.append(h)
    return jnp.stack(hs, axis=0), h


# TODO(synk): `decode` (Linear + log_softmax) is not part of forward(); omitted here.

if __name__ == "__main__":
    T, B, I, H = 8, 8, 16, 32

    key = jax.random.PRNGKey(0)
    k_x, k_h, k_p = jax.random.split(key, 3)
    x = jax.random.normal(k_x, (T, B, I), jnp.float32)
    h0 = jax.random.normal(k_h, (B, H), jnp.float32)
    params = init_params(k_p, I, H)

    ref_all, ref_last = gru_reference(x, h0, params)

    # f32 MXU path: tight check against the pure-JAX reference.
    h_all, h_last = gru_forward(x, h0, params, mxu_dtype=jnp.float32, time_block=8)
    jax.block_until_ready((h_all, h_last))
    assert h_all.shape == (T, B, H) and h_last.shape == (B, H)
    assert jnp.allclose(h_all, ref_all, atol=1e-4, rtol=1e-4)
    assert jnp.allclose(h_last, ref_last, atol=1e-4, rtol=1e-4)

    # bf16-operand MXU path (v6e/v7x fast path; f32 accumulate + f32 gate math).
    h_all_bf, h_last_bf = gru_forward(x, h0, params, mxu_dtype=jnp.bfloat16,
                                      time_block=8)
    jax.block_until_ready((h_all_bf, h_last_bf))
    assert h_all_bf.shape == (T, B, H)
    assert float(jnp.max(jnp.abs(h_all_bf - ref_all))) < 0.1
    assert float(jnp.max(jnp.abs(h_last_bf - ref_last))) < 0.1

    print("KERNEL_OK")
</pallas_src>

<mosaic_0001>
module attributes {stable_mosaic.version = 11 : i64} {
  func.func @kernel(%arg0: i32, %arg1: i32, %arg2: memref<8x8x384xf32, #tpu.memory_space<vmem>>, %arg3: memref<8x128xf32, #tpu.memory_space<vmem>>, %arg4: memref<128x256xf32, #tpu.memory_space<vmem>>, %arg5: memref<128x128xf32, #tpu.memory_space<vmem>>, %arg6: memref<8x8x128xf32, #tpu.memory_space<vmem>>, %arg7: memref<8x128xf32, #tpu.memory_space<vmem>>) attributes {dimension_semantics = [#tpu.dimension_semantics<parallel>, #tpu.dimension_semantics<arbitrary>], iteration_bounds = array<i64: 1, 1>, scalar_prefetch = 0 : i64, scratch_operands = 1 : i64, tpu.core_type = #tpu.core_type<tc>, window_params = [{transform_indices = @transform_0, window_bounds = array<i64: 8, 8, 384>}, {transform_indices = @transform_1, window_bounds = array<i64: 8, 128>}, {pipeline_mode = #tpu.pipeline_mode<synchronous>, transform_indices = @transform_2, window_bounds = array<i64: 128, 256>}, {pipeline_mode = #tpu.pipeline_mode<synchronous>, transform_indices = @transform_3, window_bounds = array<i64: 128, 128>}, {transform_indices = @transform_4, window_bounds = array<i64: 8, 8, 128>}]} {
    %c0_i32 = arith.constant 0 : i32
    %0 = arith.cmpi eq, %arg1, %c0_i32 : i32
    %1 = arith.extui %0 : i1 to i32
    %c0_i32_0 = arith.constant 0 : i32
    %2 = arith.cmpi ne, %1, %c0_i32_0 : i32
    scf.if %2 {
      %c0_80 = arith.constant 0 : index
      %c0_81 = arith.constant 0 : index
      %279 = vector.load %arg3[%c0_80, %c0_81] : memref<8x128xf32, #tpu.memory_space<vmem>>, vector<8x128xf32>
      %c0_82 = arith.constant 0 : index
      %c0_83 = arith.constant 0 : index
      %280 = vector.load %arg7[%c0_82, %c0_83] : memref<8x128xf32, #tpu.memory_space<vmem>>, vector<8x128xf32>
      tpu.vector_store %arg7[%c0_82, %c0_83], %279 {strides = array<i32>} : memref<8x128xf32, #tpu.memory_space<vmem>>, vector<8x128xf32>,
    } else {
    }
    %c0 = arith.constant 0 : index
    %c0_1 = arith.constant 0 : index
    %3 = vector.load %arg4[%c0, %c0_1] : memref<128x256xf32, #tpu.memory_space<vmem>>, vector<128x256xf32>
    %c0_2 = arith.constant 0 : index
    %c0_3 = arith.constant 0 : index
    %4 = vector.load %arg5[%c0_2, %c0_3] : memref<128x128xf32, #tpu.memory_space<vmem>>, vector<128x128xf32>
    %c0_4 = arith.constant 0 : index
    %c0_5 = arith.constant 0 : index
    %5 = vector.load %arg7[%c0_4, %c0_5] : memref<8x128xf32, #tpu.memory_space<vmem>>, vector<8x128xf32>
    %c0_i32_6 = arith.constant 0 : i32
    %6 = arith.index_cast %c0_i32_6 : i32 to index
    %c0_7 = arith.constant 0 : index
    %c0_8 = arith.constant 0 : index
    %7 = vector.load %arg2[%6, %c0_7, %c0_8] : memref<8x8x384xf32, #tpu.memory_space<vmem>>, vector<1x8x384xf32>
    %8 = vector.shape_cast %7 : vector<1x8x384xf32> to vector<8x384xf32>
    %cst = arith.constant dense<0.000000e+00> : vector<8x256xf32>
    %9 = tpu.matmul %5, %3, %cst {dimension_numbers = #tpu.dot_dimension_numbers<[1], [0], [0], [1], [0, 0, 1, 1], [], []>} : vector<8x128xf32>, vector<128x256xf32>, vector<8x256xf32> -> vector<8x256xf32>
    %10 = vector.extract_strided_slice %9 {offsets = [0, 0], sizes = [8, 128], strides = [1, 1]} : vector<8x256xf32> to vector<8x128xf32>
    %11 = vector.extract_strided_slice %8 {offsets = [0, 0], sizes = [8, 128], strides = [1, 1]} : vector<8x384xf32> to vector<8x128xf32>
    %12 = arith.addf %10, %11 : vector<8x128xf32>
    %13 = arith.negf %12 : vector<8x128xf32>
    %14 = math.exp %13 : vector<8x128xf32>
    %cst_9 = arith.constant 1.000000e+00 : f32
    %15 = vector.broadcast %cst_9 : f32 to vector<8x128xf32>
    %16 = arith.addf %15, %14 : vector<8x128xf32>
    %17 = arith.divf %15, %16 : vector<8x128xf32>
    %18 = vector.extract_strided_slice %9 {offsets = [0, 128], sizes = [8, 128], strides = [1, 1]} : vector<8x256xf32> to vector<8x128xf32>
    %19 = vector.extract_strided_slice %8 {offsets = [0, 128], sizes = [8, 128], strides = [1, 1]} : vector<8x384xf32> to vector<8x128xf32>
    %20 = arith.addf %18, %19 : vector<8x128xf32>
    %21 = arith.negf %20 : vector<8x128xf32>
    %22 = math.exp %21 : vector<8x128xf32>
    %cst_10 = arith.constant 1.000000e+00 : f32
    %23 = vector.broadcast %cst_10 : f32 to vector<8x128xf32>
    %24 = arith.addf %23, %22 : vector<8x128xf32>
    %25 = arith.divf %23, %24 : vector<8x128xf32>
    %26 = arith.mulf %25, %5 : vector<8x128xf32>
    %cst_11 = arith.constant dense<0.000000e+00> : vector<8x128xf32>
    %27 = tpu.matmul %26, %4, %cst_11 {dimension_numbers = #tpu.dot_dimension_numbers<[1], [0], [0], [1], [0, 0, 1, 1], [], []>} : vector<8x128xf32>, vector<128x128xf32>, vector<8x128xf32> -> vector<8x128xf32>
    %28 = vector.extract_strided_slice %8 {offsets = [0, 256], sizes = [8, 128], strides = [1, 1]} : vector<8x384xf32> to vector<8x128xf32>
    %29 = arith.addf %27, %28 : vector<8x128xf32>
    %30 = math.tanh %29 : vector<8x128xf32>
    %cst_12 = arith.constant 1.000000e+00 : f32
    %31 = vector.broadcast %cst_12 : f32 to vector<8x128xf32>
    %32 = arith.subf %31, %17 : vector<8x128xf32>
    %33 = arith.mulf %32, %5 : vector<8x128xf32>
    %34 = arith.mulf %17, %30 : vector<8x128xf32>
    %35 = arith.addf %33, %34 : vector<8x128xf32>
    %36 = arith.index_cast %c0_i32_6 : i32 to index
    %c0_13 = arith.constant 0 : index
    %c0_14 = arith.constant 0 : index
    %37 = vector.load %arg6[%36, %c0_13, %c0_14] : memref<8x8x128xf32, #tpu.memory_space<vmem>>, vector<1x8x128xf32>
    %38 = vector.shape_cast %37 : vector<1x8x128xf32> to vector<8x128xf32>
    %39 = vector.shape_cast %35 : vector<8x128xf32> to vector<1x8x128xf32>
    tpu.vector_store %arg6[%36, %c0_13, %c0_14], %39 {strides = array<i32>} : memref<8x8x128xf32, #tpu.memory_space<vmem>>, vector<1x8x128xf32>,
    %c1_i32 = arith.constant 1 : i32
    %40 = arith.index_cast %c1_i32 : i32 to index
    %c0_15 = arith.constant 0 : index
    %c0_16 = arith.constant 0 : index
    %41 = vector.load %arg2[%40, %c0_15, %c0_16] : memref<8x8x384xf32, #tpu.memory_space<vmem>>, vector<1x8x384xf32>
    %42 = vector.shape_cast %41 : vector<1x8x384xf32> to vector<8x384xf32>
    %cst_17 = arith.constant dense<0.000000e+00> : vector<8x256xf32>
    %43 = tpu.matmul %35, %3, %cst_17 {dimension_numbers = #tpu.dot_dimension_numbers<[1], [0], [0], [1], [0, 0, 1, 1], [], []>} : vector<8x128xf32>, vector<128x256xf32>, vector<8x256xf32> -> vector<8x256xf32>
    %44 = vector.extract_strided_slice %43 {offsets = [0, 0], sizes = [8, 128], strides = [1, 1]} : vector<8x256xf32> to vector<8x128xf32>
    %45 = vector.extract_strided_slice %42 {offsets = [0, 0], sizes = [8, 128], strides = [1, 1]} : vector<8x384xf32> to vector<8x128xf32>
    %46 = arith.addf %44, %45 : vector<8x128xf32>
    %47 = arith.negf %46 : vector<8x128xf32>
    %48 = math.exp %47 : vector<8x128xf32>
    %cst_18 = arith.constant 1.000000e+00 : f32
    %49 = vector.broadcast %cst_18 : f32 to vector<8x128xf32>
    %50 = arith.addf %49, %48 : vector<8x128xf32>
    %51 = arith.divf %49, %50 : vector<8x128xf32>
    %52 = vector.extract_strided_slice %43 {offsets = [0, 128], sizes = [8, 128], strides = [1, 1]} : vector<8x256xf32> to vector<8x128xf32>
    %53 = vector.extract_strided_slice %42 {offsets = [0, 128], sizes = [8, 128], strides = [1, 1]} : vector<8x384xf32> to vector<8x128xf32>
    %54 = arith.addf %52, %53 : vector<8x128xf32>
    %55 = arith.negf %54 : vector<8x128xf32>
    %56 = math.exp %55 : vector<8x128xf32>
    %cst_19 = arith.constant 1.000000e+00 : f32
    %57 = vector.broadcast %cst_19 : f32 to vector<8x128xf32>
    %58 = arith.addf %57, %56 : vector<8x128xf32>
    %59 = arith.divf %57, %58 : vector<8x128xf32>
    %60 = arith.mulf %59, %35 : vector<8x128xf32>
    %cst_20 = arith.constant dense<0.000000e+00> : vector<8x128xf32>
    %61 = tpu.matmul %60, %4, %cst_20 {dimension_numbers = #tpu.dot_dimension_numbers<[1], [0], [0], [1], [0, 0, 1, 1], [], []>} : vector<8x128xf32>, vector<128x128xf32>, vector<8x128xf32> -> vector<8x128xf32>
    %62 = vector.extract_strided_slice %42 {offsets = [0, 256], sizes = [8, 128], strides = [1, 1]} : vector<8x384xf32> to vector<8x128xf32>
    %63 = arith.addf %61, %62 : vector<8x128xf32>
    %64 = math.tanh %63 : vector<8x128xf32>
    %cst_21 = arith.constant 1.000000e+00 : f32
    %65 = vector.broadcast %cst_21 : f32 to vector<8x128xf32>
    %66 = arith.subf %65, %51 : vector<8x128xf32>
    %67 = arith.mulf %66, %35 : vector<8x128xf32>
    %68 = arith.mulf %51, %64 : vector<8x128xf32>
    %69 = arith.addf %67, %68 : vector<8x128xf32>
    %70 = arith.index_cast %c1_i32 : i32 to index
    %c0_22 = arith.constant 0 : index
    %c0_23 = arith.constant 0 : index
    %71 = vector.load %arg6[%70, %c0_22, %c0_23] : memref<8x8x128xf32, #tpu.memory_space<vmem>>, vector<1x8x128xf32>
    %72 = vector.shape_cast %71 : vector<1x8x128xf32> to vector<8x128xf32>
    %73 = vector.shape_cast %69 : vector<8x128xf32> to vector<1x8x128xf32>
    tpu.vector_store %arg6[%70, %c0_22, %c0_23], %73 {strides = array<i32>} : memref<8x8x128xf32, #tpu.memory_space<vmem>>, vector<1x8x128xf32>,
    %c2_i32 = arith.constant 2 : i32
    %74 = arith.index_cast %c2_i32 : i32 to index
    %c0_24 = arith.constant 0 : index
    %c0_25 = arith.constant 0 : index
    %75 = vector.load %arg2[%74, %c0_24, %c0_25] : memref<8x8x384xf32, #tpu.memory_space<vmem>>, vector<1x8x384xf32>
    %76 = vector.shape_cast %75 : vector<1x8x384xf32> to vector<8x384xf32>
    %cst_26 = arith.constant dense<0.000000e+00> : vector<8x256xf32>
    %77 = tpu.matmul %69, %3, %cst_26 {dimension_numbers = #tpu.dot_dimension_numbers<[1], [0], [0], [1], [0, 0, 1, 1], [], []>} : vector<8x128xf32>, vector<128x256xf32>, vector<8x256xf32> -> vector<8x256xf32>
    %78 = vector.extract_strided_slice %77 {offsets = [0, 0], sizes = [8, 128], strides = [1, 1]} : vector<8x256xf32> to vector<8x128xf32>
    %79 = vector.extract_strided_slice %76 {offsets = [0, 0], sizes = [8, 128], strides = [1, 1]} : vector<8x384xf32> to vector<8x128xf32>
    %80 = arith.addf %78, %79 : vector<8x128xf32>
    %81 = arith.negf %80 : vector<8x128xf32>
    %82 = math.exp %81 : vector<8x128xf32>
    %cst_27 = arith.constant 1.000000e+00 : f32
    %83 = vector.broadcast %cst_27 : f32 to vector<8x128xf32>
    %84 = arith.addf %83, %82 : vector<8x128xf32>
    %85 = arith.divf %83, %84 : vector<8x128xf32>
    %86 = vector.extract_strided_slice %77 {offsets = [0, 128], sizes = [8, 128], strides = [1, 1]} : vector<8x256xf32> to vector<8x128xf32>
    %87 = vector.extract_strided_slice %76 {offsets = [0, 128], sizes = [8, 128], strides = [1, 1]} : vector<8x384xf32> to vector<8x128xf32>
    %88 = arith.addf %86, %87 : vector<8x128xf32>
    %89 = arith.negf %88 : vector<8x128xf32>
    %90 = math.exp %89 : vector<8x128xf32>
    %cst_28 = arith.constant 1.000000e+00 : f32
    %91 = vector.broadcast %cst_28 : f32 to vector<8x128xf32>
    %92 = arith.addf %91, %90 : vector<8x128xf32>
    %93 = arith.divf %91, %92 : vector<8x128xf32>
    %94 = arith.mulf %93, %69 : vector<8x128xf32>
    %cst_29 = arith.constant dense<0.000000e+00> : vector<8x128xf32>
    %95 = tpu.matmul %94, %4, %cst_29 {dimension_numbers = #tpu.dot_dimension_numbers<[1], [0], [0], [1], [0, 0, 1, 1], [], []>} : vector<8x128xf32>, vector<128x128xf32>, vector<8x128xf32> -> vector<8x128xf32>
    %96 = vector.extract_strided_slice %76 {offsets = [0, 256], sizes = [8, 128], strides = [1, 1]} : vector<8x384xf32> to vector<8x128xf32>
    %97 = arith.addf %95, %96 : vector<8x128xf32>
    %98 = math.tanh %97 : vector<8x128xf32>
    %cst_30 = arith.constant 1.000000e+00 : f32
    %99 = vector.broadcast %cst_30 : f32 to vector<8x128xf32>
    %100 = arith.subf %99, %85 : vector<8x128xf32>
    %101 = arith.mulf %100, %69 : vector<8x128xf32>
    %102 = arith.mulf %85, %98 : vector<8x128xf32>
    %103 = arith.addf %101, %102 : vector<8x128xf32>
    %104 = arith.index_cast %c2_i32 : i32 to index
    %c0_31 = arith.constant 0 : index
    %c0_32 = arith.constant 0 : index
    %105 = vector.load %arg6[%104, %c0_31, %c0_32] : memref<8x8x128xf32, #tpu.memory_space<vmem>>, vector<1x8x128xf32>
    %106 = vector.shape_cast %105 : vector<1x8x128xf32> to vector<8x128xf32>
    %107 = vector.shape_cast %103 : vector<8x128xf32> to vector<1x8x128xf32>
    tpu.vector_store %arg6[%104, %c0_31, %c0_32], %107 {strides = array<i32>} : memref<8x8x128xf32, #tpu.memory_space<vmem>>, vector<1x8x128xf32>,
    %c3_i32 = arith.constant 3 : i32
    %108 = arith.index_cast %c3_i32 : i32 to index
    %c0_33 = arith.constant 0 : index
    %c0_34 = arith.constant 0 : index
    %109 = vector.load %arg2[%108, %c0_33, %c0_34] : memref<8x8x384xf32, #tpu.memory_space<vmem>>, vector<1x8x384xf32>
    %110 = vector.shape_cast %109 : vector<1x8x384xf32> to vector<8x384xf32>
    %cst_35 = arith.constant dense<0.000000e+00> : vector<8x256xf32>
    %111 = tpu.matmul %103, %3, %cst_35 {dimension_numbers = #tpu.dot_dimension_numbers<[1], [0], [0], [1], [0, 0, 1, 1], [], []>} : vector<8x128xf32>, vector<128x256xf32>, vector<8x256xf32> -> vector<8x256xf32>
    %112 = vector.extract_strided_slice %111 {offsets = [0, 0], sizes = [8, 128], strides = [1, 1]} : vector<8x256xf32> to vector<8x128xf32>
    %113 = vector.extract_strided_slice %110 {offsets = [0, 0], sizes = [8, 128], strides = [1, 1]} : vector<8x384xf32> to vector<8x128xf32>
    %114 = arith.addf %112, %113 : vector<8x128xf32>
    %115 = arith.negf %114 : vector<8x128xf32>
    %116 = math.exp %115 : vector<8x128xf32>
    %cst_36 = arith.constant 1.000000e+00 : f32
    %117 = vector.broadcast %cst_36 : f32 to vector<8x128xf32>
    %118 = arith.addf %117, %116 : vector<8x128xf32>
    %119 = arith.divf %117, %118 : vector<8x128xf32>
    %120 = vector.extract_strided_slice %111 {offsets = [0, 128], sizes = [8, 128], strides = [1, 1]} : vector<8x256xf32> to vector<8x128xf32>
    %121 = vector.extract_strided_slice %110 {offsets = [0, 128], sizes = [8, 128], strides = [1, 1]} : vector<8x384xf32> to vector<8x128xf32>
    %122 = arith.addf %120, %121 : vector<8x128xf32>
    %123 = arith.negf %122 : vector<8x128xf32>
    %124 = math.exp %123 : vector<8x128xf32>
    %cst_37 = arith.constant 1.000000e+00 : f32
    %125 = vector.broadcast %cst_37 : f32 to vector<8x128xf32>
    %126 = arith.addf %125, %124 : vector<8x128xf32>
    %127 = arith.divf %125, %126 : vector<8x128xf32>
    %128 = arith.mulf %127, %103 : vector<8x128xf32>
    %cst_38 = arith.constant dense<0.000000e+00> : vector<8x128xf32>
    %129 = tpu.matmul %128, %4, %cst_38 {dimension_numbers = #tpu.dot_dimension_numbers<[1], [0], [0], [1], [0, 0, 1, 1], [], []>} : vector<8x128xf32>, vector<128x128xf32>, vector<8x128xf32> -> vector<8x128xf32>
    %130 = vector.extract_strided_slice %110 {offsets = [0, 256], sizes = [8, 128], strides = [1, 1]} : vector<8x384xf32> to vector<8x128xf32>
    %131 = arith.addf %129, %130 : vector<8x128xf32>
    %132 = math.tanh %131 : vector<8x128xf32>
    %cst_39 = arith.constant 1.000000e+00 : f32
    %133 = vector.broadcast %cst_39 : f32 to vector<8x128xf32>
    %134 = arith.subf %133, %119 : vector<8x128xf32>
    %135 = arith.mulf %134, %103 : vector<8x128xf32>
    %136 = arith.mulf %119, %132 : vector<8x128xf32>
    %137 = arith.addf %135, %136 : vector<8x128xf32>
    %138 = arith.index_cast %c3_i32 : i32 to index
    %c0_40 = arith.constant 0 : index
    %c0_41 = arith.constant 0 : index
    %139 = vector.load %arg6[%138, %c0_40, %c0_41] : memref<8x8x128xf32, #tpu.memory_space<vmem>>, vector<1x8x128xf32>
    %140 = vector.shape_cast %139 : vector<1x8x128xf32> to vector<8x128xf32>
    %141 = vector.shape_cast %137 : vector<8x128xf32> to vector<1x8x128xf32>
    tpu.vector_store %arg6[%138, %c0_40, %c0_41], %141 {strides = array<i32>} : memref<8x8x128xf32, #tpu.memory_space<vmem>>, vector<1x8x128xf32>,
    %c4_i32 = arith.constant 4 : i32
    %142 = arith.index_cast %c4_i32 : i32 to index
    %c0_42 = arith.constant 0 : index
    %c0_43 = arith.constant 0 : index
    %143 = vector.load %arg2[%142, %c0_42, %c0_43] : memref<8x8x384xf32, #tpu.memory_space<vmem>>, vector<1x8x384xf32>
    %144 = vector.shape_cast %143 : vector<1x8x384xf32> to vector<8x384xf32>
    %cst_44 = arith.constant dense<0.000000e+00> : vector<8x256xf32>
    %145 = tpu.matmul %137, %3, %cst_44 {dimension_numbers = #tpu.dot_dimension_numbers<[1], [0], [0], [1], [0, 0, 1, 1], [], []>} : vector<8x128xf32>, vector<128x256xf32>, vector<8x256xf32> -> vector<8x256xf32>
    %146 = vector.extract_strided_slice %145 {offsets = [0, 0], sizes = [8, 128], strides = [1, 1]} : vector<8x256xf32> to vector<8x128xf32>
    %147 = vector.extract_strided_slice %144 {offsets = [0, 0], sizes = [8, 128], strides = [1, 1]} : vector<8x384xf32> to vector<8x128xf32>
    %148 = arith.addf %146, %147 : vector<8x128xf32>
    %149 = arith.negf %148 : vector<8x128xf32>
    %150 = math.exp %149 : vector<8x128xf32>
    %cst_45 = arith.constant 1.000000e+00 : f32
    %151 = vector.broadcast %cst_45 : f32 to vector<8x128xf32>
    %152 = arith.addf %151, %150 : vector<8x128xf32>
    %153 = arith.divf %151, %152 : vector<8x128xf32>
    %154 = vector.extract_strided_slice %145 {offsets = [0, 128], sizes = [8, 128], strides = [1, 1]} : vector<8x256xf32> to vector<8x128xf32>
    %155 = vector.extract_strided_slice %144 {offsets = [0, 128], sizes = [8, 128], strides = [1, 1]} : vector<8x384xf32> to vector<8x128xf32>
    %156 = arith.addf %154, %155 : vector<8x128xf32>
    %157 = arith.negf %156 : vector<8x128xf32>
    %158 = math.exp %157 : vector<8x128xf32>
    %cst_46 = arith.constant 1.000000e+00 : f32
    %159 = vector.broadcast %cst_46 : f32 to vector<8x128xf32>
    %160 = arith.addf %159, %158 : vector<8x128xf32>
    %161 = arith.divf %159, %160 : vector<8x128xf32>
    %162 = arith.mulf %161, %137 : vector<8x128xf32>
    %cst_47 = arith.constant dense<0.000000e+00> : vector<8x128xf32>
    %163 = tpu.matmul %162, %4, %cst_47 {dimension_numbers = #tpu.dot_dimension_numbers<[1], [0], [0], [1], [0, 0, 1, 1], [], []>} : vector<8x128xf32>, vector<128x128xf32>, vector<8x128xf32> -> vector<8x128xf32>
    %164 = vector.extract_strided_slice %144 {offsets = [0, 256], sizes = [8, 128], strides = [1, 1]} : vector<8x384xf32> to vector<8x128xf32>
    %165 = arith.addf %163, %164 : vector<8x128xf32>
    %166 = math.tanh %165 : vector<8x128xf32>
    %cst_48 = arith.constant 1.000000e+00 : f32
    %167 = vector.broadcast %cst_48 : f32 to vector<8x128xf32>
    %168 = arith.subf %167, %153 : vector<8x128xf32>
    %169 = arith.mulf %168, %137 : vector<8x128xf32>
    %170 = arith.mulf %153, %166 : vector<8x128xf32>
    %171 = arith.addf %169, %170 : vector<8x128xf32>
    %172 = arith.index_cast %c4_i32 : i32 to index
    %c0_49 = arith.constant 0 : index
    %c0_50 = arith.constant 0 : index
    %173 = vector.load %arg6[%172, %c0_49, %c0_50] : memref<8x8x128xf32, #tpu.memory_space<vmem>>, vector<1x8x128xf32>
    %174 = vector.shape_cast %173 : vector<1x8x128xf32> to vector<8x128xf32>
    %175 = vector.shape_cast %171 : vector<8x128xf32> to vector<1x8x128xf32>
    tpu.vector_store %arg6[%172, %c0_49, %c0_50], %175 {strides = array<i32>} : memref<8x8x128xf32, #tpu.memory_space<vmem>>, vector<1x8x128xf32>,
    %c5_i32 = arith.constant 5 : i32
    %176 = arith.index_cast %c5_i32 : i32 to index
    %c0_51 = arith.constant 0 : index
    %c0_52 = arith.constant 0 : index
    %177 = vector.load %arg2[%176, %c0_51, %c0_52] : memref<8x8x384xf32, #tpu.memory_space<vmem>>, vector<1x8x384xf32>
    %178 = vector.shape_cast %177 : vector<1x8x384xf32> to vector<8x384xf32>
    %cst_53 = arith.constant dense<0.000000e+00> : vector<8x256xf32>
    %179 = tpu.matmul %171, %3, %cst_53 {dimension_numbers = #tpu.dot_dimension_numbers<[1], [0], [0], [1], [0, 0, 1, 1], [], []>} : vector<8x128xf32>, vector<128x256xf32>, vector<8x256xf32> -> vector<8x256xf32>
    %180 = vector.extract_strided_slice %179 {offsets = [0, 0], sizes = [8, 128], strides = [1, 1]} : vector<8x256xf32> to vector<8x128xf32>
    %181 = vector.extract_strided_slice %178 {offsets = [0, 0], sizes = [8, 128], strides = [1, 1]} : vector<8x384xf32> to vector<8x128xf32>
    %182 = arith.addf %180, %181 : vector<8x128xf32>
    %183 = arith.negf %182 : vector<8x128xf32>
    %184 = math.exp %183 : vector<8x128xf32>
    %cst_54 = arith.constant 1.000000e+00 : f32
    %185 = vector.broadcast %cst_54 : f32 to vector<8x128xf32>
    %186 = arith.addf %185, %184 : vector<8x128xf32>
    %187 = arith.divf %185, %186 : vector<8x128xf32>
    %188 = vector.extract_strided_slice %179 {offsets = [0, 128], sizes = [8, 128], strides = [1, 1]} : vector<8x256xf32> to vector<8x128xf32>
    %189 = vector.extract_strided_slice %178 {offsets = [0, 128], sizes = [8, 128], strides = [1, 1]} : vector<8x384xf32> to vector<8x128xf32>
    %190 = arith.addf %188, %189 : vector<8x128xf32>
    %191 = arith.negf %190 : vector<8x128xf32>
    %192 = math.exp %191 : vector<8x128xf32>
    %cst_55 = arith.constant 1.000000e+00 : f32
    %193 = vector.broadcast %cst_55 : f32 to vector<8x128xf32>
    %194 = arith.addf %193, %192 : vector<8x128xf32>
    %195 = arith.divf %193, %194 : vector<8x128xf32>
    %196 = arith.mulf %195, %171 : vector<8x128xf32>
    %cst_56 = arith.constant dense<0.000000e+00> : vector<8x128xf32>
    %197 = tpu.matmul %196, %4, %cst_56 {dimension_numbers = #tpu.dot_dimension_numbers<[1], [0], [0], [1], [0, 0, 1, 1], [], []>} : vector<8x128xf32>, vector<128x128xf32>, vector<8x128xf32> -> vector<8x128xf32>
    %198 = vector.extract_strided_slice %178 {offsets = [0, 256], sizes = [8, 128], strides = [1, 1]} : vector<8x384xf32> to vector<8x128xf32>
    %199 = arith.addf %197, %198 : vector<8x128xf32>
    %200 = math.tanh %199 : vector<8x128xf32>
    %cst_57 = arith.constant 1.000000e+00 : f32
    %201 = vector.broadcast %cst_57 : f32 to vector<8x128xf32>
    %202 = arith.subf %201, %187 : vector<8x128xf32>
    %203 = arith.mulf %202, %171 : vector<8x128xf32>
    %204 = arith.mulf %187, %200 : vector<8x128xf32>
    %205 = arith.addf %203, %204 : vector<8x128xf32>
    %206 = arith.index_cast %c5_i32 : i32 to index
    %c0_58 = arith.constant 0 : index
    %c0_59 = arith.constant 0 : index
    %207 = vector.load %arg6[%206, %c0_58, %c0_59] : memref<8x8x128xf32, #tpu.memory_space<vmem>>, vector<1x8x128xf32>
    %208 = vector.shape_cast %207 : vector<1x8x128xf32> to vector<8x128xf32>
    %209 = vector.shape_cast %205 : vector<8x128xf32> to vector<1x8x128xf32>
    tpu.vector_store %arg6[%206, %c0_58, %c0_59], %209 {strides = array<i32>} : memref<8x8x128xf32, #tpu.memory_space<vmem>>, vector<1x8x128xf32>,
    %c6_i32 = arith.constant 6 : i32
    %210 = arith.index_cast %c6_i32 : i32 to index
    %c0_60 = arith.constant 0 : index
    %c0_61 = arith.constant 0 : index
    %211 = vector.load %arg2[%210, %c0_60, %c0_61] : memref<8x8x384xf32, #tpu.memory_space<vmem>>, vector<1x8x384xf32>
    %212 = vector.shape_cast %211 : vector<1x8x384xf32> to vector<8x384xf32>
    %cst_62 = arith.constant dense<0.000000e+00> : vector<8x256xf32>
    %213 = tpu.matmul %205, %3, %cst_62 {dimension_numbers = #tpu.dot_dimension_numbers<[1], [0], [0], [1], [0, 0, 1, 1], [], []>} : vector<8x128xf32>, vector<128x256xf32>, vector<8x256xf32> -> vector<8x256xf32>
    %214 = vector.extract_strided_slice %213 {offsets = [0, 0], sizes = [8, 128], strides = [1, 1]} : vector<8x256xf32> to vector<8x128xf32>
    %215 = vector.extract_strided_slice %212 {offsets = [0, 0], sizes = [8, 128], strides = [1, 1]} : vector<8x384xf32> to vector<8x128xf32>
    %216 = arith.addf %214, %215 : vector<8x128xf32>
    %217 = arith.negf %216 : vector<8x128xf32>
    %218 = math.exp %217 : vector<8x128xf32>
    %cst_63 = arith.constant 1.000000e+00 : f32
    %219 = vector.broadcast %cst_63 : f32 to vector<8x128xf32>
    %220 = arith.addf %219, %218 : vector<8x128xf32>
    %221 = arith.divf %219, %220 : vector<8x128xf32>
    %222 = vector.extract_strided_slice %213 {offsets = [0, 128], sizes = [8, 128], strides = [1, 1]} : vector<8x256xf32> to vector<8x128xf32>
    %223 = vector.extract_strided_slice %212 {offsets = [0, 128], sizes = [8, 128], strides = [1, 1]} : vector<8x384xf32> to vector<8x128xf32>
    %224 = arith.addf %222, %223 : vector<8x128xf32>
    %225 = arith.negf %224 : vector<8x128xf32>
    %226 = math.exp %225 : vector<8x128xf32>
    %cst_64 = arith.constant 1.000000e+00 : f32
    %227 = vector.broadcast %cst_64 : f32 to vector<8x128xf32>
    %228 = arith.addf %227, %226 : vector<8x128xf32>
    %229 = arith.divf %227, %228 : vector<8x128xf32>
    %230 = arith.mulf %229, %205 : vector<8x128xf32>
    %cst_65 = arith.constant dense<0.000000e+00> : vector<8x128xf32>
    %231 = tpu.matmul %230, %4, %cst_65 {dimension_numbers = #tpu.dot_dimension_numbers<[1], [0], [0], [1], [0, 0, 1, 1], [], []>} : vector<8x128xf32>, vector<128x128xf32>, vector<8x128xf32> -> vector<8x128xf32>
    %232 = vector.extract_strided_slice %212 {offsets = [0, 256], sizes = [8, 128], strides = [1, 1]} : vector<8x384xf32> to vector<8x128xf32>
    %233 = arith.addf %231, %232 : vector<8x128xf32>
    %234 = math.tanh %233 : vector<8x128xf32>
    %cst_66 = arith.constant 1.000000e+00 : f32
    %235 = vector.broadcast %cst_66 : f32 to vector<8x128xf32>
    %236 = arith.subf %235, %221 : vector<8x128xf32>
    %237 = arith.mulf %236, %205 : vector<8x128xf32>
    %238 = arith.mulf %221, %234 : vector<8x128xf32>
    %239 = arith.addf %237, %238 : vector<8x128xf32>
    %240 = arith.index_cast %c6_i32 : i32 to index
    %c0_67 = arith.constant 0 : index
    %c0_68 = arith.constant 0 : index
    %241 = vector.load %arg6[%240, %c0_67, %c0_68] : memref<8x8x128xf32, #tpu.memory_space<vmem>>, vector<1x8x128xf32>
    %242 = vector.shape_cast %241 : vector<1x8x128xf32> to vector<8x128xf32>
    %243 = vector.shape_cast %239 : vector<8x128xf32> to vector<1x8x128xf32>
    tpu.vector_store %arg6[%240, %c0_67, %c0_68], %243 {strides = array<i32>} : memref<8x8x128xf32, #tpu.memory_space<vmem>>, vector<1x8x128xf32>,
    %c7_i32 = arith.constant 7 : i32
    %244 = arith.index_cast %c7_i32 : i32 to index
    %c0_69 = arith.constant 0 : index
    %c0_70 = arith.constant 0 : index
    %245 = vector.load %arg2[%244, %c0_69, %c0_70] : memref<8x8x384xf32, #tpu.memory_space<vmem>>, vector<1x8x384xf32>
    %246 = vector.shape_cast %245 : vector<1x8x384xf32> to vector<8x384xf32>
    %cst_71 = arith.constant dense<0.000000e+00> : vector<8x256xf32>
    %247 = tpu.matmul %239, %3, %cst_71 {dimension_numbers = #tpu.dot_dimension_numbers<[1], [0], [0], [1], [0, 0, 1, 1], [], []>} : vector<8x128xf32>, vector<128x256xf32>, vector<8x256xf32> -> vector<8x256xf32>
    %248 = vector.extract_strided_slice %247 {offsets = [0, 0], sizes = [8, 128], strides = [1, 1]} : vector<8x256xf32> to vector<8x128xf32>
    %249 = vector.extract_strided_slice %246 {offsets = [0, 0], sizes = [8, 128], strides = [1, 1]} : vector<8x384xf32> to vector<8x128xf32>
    %250 = arith.addf %248, %249 : vector<8x128xf32>
    %251 = arith.negf %250 : vector<8x128xf32>
    %252 = math.exp %251 : vector<8x128xf32>
    %cst_72 = arith.constant 1.000000e+00 : f32
    %253 = vector.broadcast %cst_72 : f32 to vector<8x128xf32>
    %254 = arith.addf %253, %252 : vector<8x128xf32>
    %255 = arith.divf %253, %254 : vector<8x128xf32>
    %256 = vector.extract_strided_slice %247 {offsets = [0, 128], sizes = [8, 128], strides = [1, 1]} : vector<8x256xf32> to vector<8x128xf32>
    %257 = vector.extract_strided_slice %246 {offsets = [0, 128], sizes = [8, 128], strides = [1, 1]} : vector<8x384xf32> to vector<8x128xf32>
    %258 = arith.addf %256, %257 : vector<8x128xf32>
    %259 = arith.negf %258 : vector<8x128xf32>
    %260 = math.exp %259 : vector<8x128xf32>
    %cst_73 = arith.constant 1.000000e+00 : f32
    %261 = vector.broadcast %cst_73 : f32 to vector<8x128xf32>
    %262 = arith.addf %261, %260 : vector<8x128xf32>
    %263 = arith.divf %261, %262 : vector<8x128xf32>
    %264 = arith.mulf %263, %239 : vector<8x128xf32>
    %cst_74 = arith.constant dense<0.000000e+00> : vector<8x128xf32>
    %265 = tpu.matmul %264, %4, %cst_74 {dimension_numbers = #tpu.dot_dimension_numbers<[1], [0], [0], [1], [0, 0, 1, 1], [], []>} : vector<8x128xf32>, vector<128x128xf32>, vector<8x128xf32> -> vector<8x128xf32>
    %266 = vector.extract_strided_slice %246 {offsets = [0, 256], sizes = [8, 128], strides = [1, 1]} : vector<8x384xf32> to vector<8x128xf32>
    %267 = arith.addf %265, %266 : vector<8x128xf32>
    %268 = math.tanh %267 : vector<8x128xf32>
    %cst_75 = arith.constant 1.000000e+00 : f32
    %269 = vector.broadcast %cst_75 : f32 to vector<8x128xf32>
    %270 = arith.subf %269, %255 : vector<8x128xf32>
    %271 = arith.mulf %270, %239 : vector<8x128xf32>
    %272 = arith.mulf %255, %268 : vector<8x128xf32>
    %273 = arith.addf %271, %272 : vector<8x128xf32>
    %274 = arith.index_cast %c7_i32 : i32 to index
    %c0_76 = arith.constant 0 : index
    %c0_77 = arith.constant 0 : index
    %275 = vector.load %arg6[%274, %c0_76, %c0_77] : memref<8x8x128xf32, #tpu.memory_space<vmem>>, vector<1x8x128xf32>
    %276 = vector.shape_cast %275 : vector<1x8x128xf32> to vector<8x128xf32>
    %277 = vector.shape_cast %273 : vector<8x128xf32> to vector<1x8x128xf32>
    tpu.vector_store %arg6[%274, %c0_76, %c0_77], %277 {strides = array<i32>} : memref<8x8x128xf32, #tpu.memory_space<vmem>>, vector<1x8x128xf32>,
    %c8_i32 = arith.constant 8 : i32
    %c0_78 = arith.constant 0 : index
    %c0_79 = arith.constant 0 : index
    %278 = vector.load %arg7[%c0_78, %c0_79] : memref<8x128xf32, #tpu.memory_space<vmem>>, vector<8x128xf32>
    tpu.vector_store %arg7[%c0_78, %c0_79], %273 {strides = array<i32>} : memref<8x128xf32, #tpu.memory_space<vmem>>, vector<8x128xf32>,
    return
  }
  func.func @transform_0(%arg0: i32, %arg1: i32) -> (i32, i32, i32) {
    %c0_i32 = arith.constant 0 : i32
    %c0_i32_0 = arith.constant 0 : i32
    return %arg1, %arg0, %c0_i32 : i32, i32, i32
  }
  func.func @transform_1(%arg0: i32, %arg1: i32) -> (i32, i32) {
    %c0_i32 = arith.constant 0 : i32
    %c0_i32_0 = arith.constant 0 : i32
    return %arg0, %c0_i32 : i32, i32
  }
  func.func @transform_2(%arg0: i32, %arg1: i32) -> (i32, i32) {
    %c0_i32 = arith.constant 0 : i32
    %c0_i32_0 = arith.constant 0 : i32
    %c0_i32_1 = arith.constant 0 : i32
    return %c0_i32, %c0_i32_0 : i32, i32
  }
  func.func @transform_3(%arg0: i32, %arg1: i32) -> (i32, i32) {
    %c0_i32 = arith.constant 0 : i32
    %c0_i32_0 = arith.constant 0 : i32
    %c0_i32_1 = arith.constant 0 : i32
    return %c0_i32, %c0_i32_0 : i32, i32
  }
  func.func @transform_4(%arg0: i32, %arg1: i32) -> (i32, i32, i32) {
    %c0_i32 = arith.constant 0 : i32
    %c0_i32_0 = arith.constant 0 : i32
    return %arg1, %arg0, %c0_i32 : i32, i32, i32
  }
}

</mosaic_0001>

<llo_original>
// kernel: gru_forward.1
$region0: #{gru_forward.1}
  #allocation0 [shape = 'u32[]', space=smem, size = 0x4, offset = 0x4, fixed_abs, tag = 'smem constant byte address 0x4 - core index']
  #allocation1 [shape = 'u32[144,128]{1,0:T(1,128)}', space=vmem, size = 0x12000, scoped, tag = 'internal scratch']
  #allocation2 [shape = 'f32[8,128]{1,0:T(8,128)}', space=vmem, size = 0x1000, scoped, tag = 'scratch operand']
  %s0 = inlined_call_operand.vmem [shape: f32[8,8,384], index: 0, kind: input, shape index: {}]
  %s1 = inlined_call_operand.vmem [shape: f32[8,128], index: 1, kind: input, shape index: {}]
  %s2 = inlined_call_operand.vmem [shape: f32[128,256], index: 2, kind: input, shape index: {}]
  %s3 = inlined_call_operand.vmem [shape: f32[128,128], index: 3, kind: input, shape index: {}]
  %s4 = inlined_call_operand.vmem [shape: f32[8,8,128], index: 4, kind: output, shape index: {}]
  %s5 = sld [smem:[#allocation0]]
  $region30: #{gru_forward.1} parent=0
    _
  %s7 = ssub.s32 1, %s5
  %s8 = scalar_select 0, %s7, %s5
  // Predicated region
  $region2: #{gru_forward.1} parent=0 // pred_check
    _
  $region3: #{gru_forward.1} parent=0 // pred_check_branch
    %10 = sbr.rel (0) target = $region5
  $region4: #{gru_forward.1} parent=0 // pred_region
    _
  $region5: #{gru_forward.1} parent=0 // pred_fallthru
    _
  // Predicated region
  $region6: #{gru_forward.1} parent=0 // pred_check
    _
  $region7: #{gru_forward.1} parent=0 // pred_check_branch
    %12 = sbr.rel (0) target = $region9
  $region8: #{gru_forward.1} parent=0 // pred_region
    _
  $region9: #{gru_forward.1} parent=0 // pred_fallthru
    _
  // Predicated region
  $region10: #{gru_forward.1} parent=0 // pred_check
    _
  $region11: #{gru_forward.1} parent=0 // pred_check_branch
    %14 = sbr.rel (0) target = $region13
  $region12: #{gru_forward.1} parent=0 // pred_region
    _
  $region13: #{gru_forward.1} parent=0 // pred_fallthru
    _
  // Predicated region
  $region14: #{gru_forward.1} parent=0 // pred_check
    _
  $region15: #{gru_forward.1} parent=0 // pred_check_branch
    %16 = sbr.rel (0) target = $region17
  $region16: #{gru_forward.1} parent=0 // pred_region
    _
  $region17: #{gru_forward.1} parent=0 // pred_fallthru
    _
  %p17 = scmp.eq.s32.totalorder 0, 0
  // Predicated region
  $region18: #{gru_forward.1} parent=0 // pred_check
    %p18 = pneg %p17
  $region19: #{gru_forward.1} parent=0 // pred_check_branch
    %20 = sbr.rel (%p18) target = $region21
  $region20: #{gru_forward.1} parent=0 // pred_region
    %v21 = vld [vmem:[%s1] sm:$0xff]
    %22 = vst [vmem:[#allocation2] sm:$0xff] %v21
  $region21: #{gru_forward.1} parent=0 // pred_fallthru
    _
  %v23 = vld [vmem:[%s2] sm:$0xff]
  %v24 = vld [vmem:[%s2 + $0x8] sm:$0xff]
  %v25 = vld [vmem:[%s2 + $0x10] sm:$0xff]
  %v26 = vld [vmem:[%s2 + $0x18] sm:$0xff]
  %v27 = vld [vmem:[%s2 + $0x20] sm:$0xff]
  %v28 = vld [vmem:[%s2 + $0x28] sm:$0xff]
  %v29 = vld [vmem:[%s2 + $0x30] sm:$0xff]
  %v30 = vld [vmem:[%s2 + $0x38] sm:$0xff]
  %v31 = vld [vmem:[%s2 + $0x40] sm:$0xff]
  %v32 = vld [vmem:[%s2 + $0x48] sm:$0xff]
  %v33 = vld [vmem:[%s2 + $0x50] sm:$0xff]
  %v34 = vld [vmem:[%s2 + $0x58] sm:$0xff]
  %v35 = vld [vmem:[%s2 + $0x60] sm:$0xff]
  %v36 = vld [vmem:[%s2 + $0x68] sm:$0xff]
  %v37 = vld [vmem:[%s2 + $0x70] sm:$0xff]
  %v38 = vld [vmem:[%s2 + $0x78] sm:$0xff]
  %v39 = vld [vmem:[%s2 + $0x80] sm:$0xff]
  %v40 = vld [vmem:[%s2 + $0x88] sm:$0xff]
  %v41 = vld [vmem:[%s2 + $0x90] sm:$0xff]
  %v42 = vld [vmem:[%s2 + $0x98] sm:$0xff]
  %v43 = vld [vmem:[%s2 + $0xa0] sm:$0xff]
  %v44 = vld [vmem:[%s2 + $0xa8] sm:$0xff]
  %v45 = vld [vmem:[%s2 + $0xb0] sm:$0xff]
  %v46 = vld [vmem:[%s2 + $0xb8] sm:$0xff]
  %v47 = vld [vmem:[%s2 + $0xc0] sm:$0xff]
  %v48 = vld [vmem:[%s2 + $0xc8] sm:$0xff]
  %v49 = vld [vmem:[%s2 + $0xd0] sm:$0xff]
  %v50 = vld [vmem:[%s2 + $0xd8] sm:$0xff]
  %v51 = vld [vmem:[%s2 + $0xe0] sm:$0xff]
  %v52 = vld [vmem:[%s2 + $0xe8] sm:$0xff]
  %v53 = vld [vmem:[%s2 + $0xf0] sm:$0xff]
  %v54 = vld [vmem:[%s2 + $0xf8] sm:$0xff]
  %v55 = vld [vmem:[%s3] sm:$0xff]
  %v56 = vld [vmem:[%s3 + $0x8] sm:$0xff]
  %v57 = vld [vmem:[%s3 + $0x10] sm:$0xff]
  %v58 = vld [vmem:[%s3 + $0x18] sm:$0xff]
  %v59 = vld [vmem:[%s3 + $0x20] sm:$0xff]
  %v60 = vld [vmem:[%s3 + $0x28] sm:$0xff]
  %v61 = vld [vmem:[%s3 + $0x30] sm:$0xff]
  %v62 = vld [vmem:[%s3 + $0x38] sm:$0xff]
  %v63 = vld [vmem:[%s3 + $0x40] sm:$0xff]
  %v64 = vld [vmem:[%s3 + $0x48] sm:$0xff]
  %v65 = vld [vmem:[%s3 + $0x50] sm:$0xff]
  %v66 = vld [vmem:[%s3 + $0x58] sm:$0xff]
  %v67 = vld [vmem:[%s3 + $0x60] sm:$0xff]
  %v68 = vld [vmem:[%s3 + $0x68] sm:$0xff]
  %v69 = vld [vmem:[%s3 + $0x70] sm:$0xff]
  %v70 = vld [vmem:[%s3 + $0x78] sm:$0xff]
  %v71 = vld [vmem:[#allocation2] sm:$0xff]
  %v72 = vld [vmem:[%s0] sm:$0xff]
  %v73 = vld [vmem:[%s0 + $0x8] sm:$0xff]
  %v74 = vld [vmem:[%s0 + $0x10] sm:$0xff]
  %75 = vmatprep.subr.mxu0 %v24
  %76 = vmatpush1.msra.mxu0 %v23
  %77 = vmatprep.subr.mxu0 %v26
  %78 = vmatpush1.msra.mxu0 %v25
  %79 = vmatprep.subr.mxu0 %v28
  %80 = vmatpush1.msra.mxu0 %v27
  %81 = vmatprep.subr.mxu0 %v30
  %82 = vmatpush1.msra.mxu0 %v29
  %83 = vmatprep.subr.mxu0 %v32
  %84 = vmatpush1.msra.mxu0 %v31
  %85 = vmatprep.subr.mxu0 %v34
  %86 = vmatpush1.msra.mxu0 %v33
  %87 = vmatprep.subr.mxu0 %v36
  %88 = vmatpush1.msra.mxu0 %v35
  %89 = vmatprep.subr.mxu0 %v38
  %90 = vmatpush1.msra.mxu0 %v37
  %91 = vmatprep.subr.mxu0 %v40
  %92 = vmatpush1.msra.mxu0 %v39
  %93 = vmatprep.subr.mxu0 %v42
  %94 = vmatpush1.msra.mxu0 %v41
  %95 = vmatprep.subr.mxu0 %v44
  %96 = vmatpush1.msra.mxu0 %v43
  %97 = vmatprep.subr.mxu0 %v46
  %98 = vmatpush1.msra.mxu0 %v45
  %99 = vmatprep.subr.mxu0 %v48
  %100 = vmatpush1.msra.mxu0 %v47
  %101 = vmatprep.subr.mxu0 %v50
  %102 = vmatpush1.msra.mxu0 %v49
  %103 = vmatprep.subr.mxu0 %v52
  %104 = vmatpush1.msra.mxu0 %v51
  %105 = vmatprep.subr.mxu0 %v54
  %106 = vmatpush1.msra.mxu0 %v53
  %107 = vmatprep.subr.mxu0 0.0
  %108 = vmatpush1.msra.mxu0 0.0
  %109 = vmatprep.subr.mxu0 0.0
  %110 = vmatpush1.msra.mxu0 0.0
  %111 = vmatprep.subr.mxu0 0.0
  %112 = vmatpush1.msra.mxu0 0.0
  %113 = vmatprep.subr.mxu0 0.0
  %114 = vmatpush1.msra.mxu0 0.0
  %115 = vmatprep.subr.mxu0 0.0
  %116 = vmatpush1.msra.mxu0 0.0
  %117 = vmatprep.subr.mxu0 0.0
  %118 = vmatpush1.msra.mxu0 0.0
  %119 = vmatprep.subr.mxu0 0.0
  %120 = vmatpush1.msra.mxu0 0.0
  %121 = vmatprep.subr.mxu0 0.0
  %122 = vmatpush1.msra.mxu0 0.0
  %123 = vmatprep.subr.mxu0 0.0
  %124 = vmatpush1.msra.mxu0 0.0
  %125 = vmatprep.subr.mxu0 0.0
  %126 = vmatpush1.msra.mxu0 0.0
  %127 = vmatprep.subr.mxu0 0.0
  %128 = vmatpush1.msra.mxu0 0.0
  %129 = vmatprep.subr.mxu0 0.0
  %130 = vmatpush1.msra.mxu0 0.0
  %131 = vmatprep.subr.mxu0 0.0
  %132 = vmatpush1.msra.mxu0 0.0
  %133 = vmatprep.subr.mxu0 0.0
  %134 = vmatpush1.msra.mxu0 0.0
  %135 = vmatprep.subr.mxu0 0.0
  %136 = vmatpush1.msra.mxu0 0.0
  %137 = vmatprep.subr.mxu0 0.0
  %138 = vmatpush1.msra.mxu0 0.0
  %139 = vmatprep.mubr.f32.mxu0 0.0
  %140 = vmatmul.mubr.f32.gmra.mrb[0].mxu0 %v71
  %v141 = vpop.f32.mrb[0].mxu0
  %v142 = vadd.f32 0.0, %v141
  %v143 = vpop.f32.mrb[0].mxu0
  %v144 = vadd.f32 0.0, %v143
  %145 = vdwg.mxu0
  %v146 = vadd.f32 %v142, %v72
  %v147 = vxor.u32 %v146, 2147483648
  %v148 = vmul.f32 %v147, 1.442695
  %v149 = vpow.pop %v148
  %v150 = vadd.f32 %v149, 1.0
  %v151 = vrcp.pop %v150
  %v152 = vmul.f32 1.0, %v151
  %v153 = vadd.f32 %v144, %v73
  %v154 = vxor.u32 %v153, 2147483648
  %v155 = vmul.f32 %v154, 1.442695
  %v156 = vpow.pop %v155
  %v157 = vadd.f32 %v156, 1.0
  %v158 = vrcp.pop %v157
  %v159 = vmul.f32 1.0, %v158
  %v160 = vmul.f32 %v159, %v71
  %161 = vmatprep.subr.mxu0 0.0
  %162 = vmatpush1.msra.mxu0 %v55
  %163 = vmatprep.subr.mxu0 0.0
  %164 = vmatpush1.msra.mxu0 %v56
  %165 = vmatprep.subr.mxu0 0.0
  %166 = vmatpush1.msra.mxu0 %v57
  %167 = vmatprep.subr.mxu0 0.0
  %168 = vmatpush1.msra.mxu0 %v58
  %169 = vmatprep.subr.mxu0 0.0
  %170 = vmatpush1.msra.mxu0 %v59
  %171 = vmatprep.subr.mxu0 0.0
  %172 = vmatpush1.msra.mxu0 %v60
  %173 = vmatprep.subr.mxu0 0.0
  %174 = vmatpush1.msra.mxu0 %v61
  %175 = vmatprep.subr.mxu0 0.0
  %176 = vmatpush1.msra.mxu0 %v62
  %177 = vmatprep.subr.mxu0 0.0
  %178 = vmatpush1.msra.mxu0 %v63
  %179 = vmatprep.subr.mxu0 0.0
  %180 = vmatpush1.msra.mxu0 %v64
  %181 = vmatprep.subr.mxu0 0.0
  %182 = vmatpush1.msra.mxu0 %v65
  %183 = vmatprep.subr.mxu0 0.0
  %184 = vmatpush1.msra.mxu0 %v66
  %185 = vmatprep.subr.mxu0 0.0
  %186 = vmatpush1.msra.mxu0 %v67
  %187 = vmatprep.subr.mxu0 0.0
  %188 = vmatpush1.msra.mxu0 %v68
  %189 = vmatprep.subr.mxu0 0.0
  %190 = vmatpush1.msra.mxu0 %v69
  %191 = vmatprep.subr.mxu0 0.0
  %192 = vmatpush1.msra.mxu0 %v70
  %193 = vmatprep.subr.mxu0 0.0
  %194 = vmatpush1.msra.mxu0 0.0
  %195 = vmatprep.subr.mxu0 0.0
  %196 = vmatpush1.msra.mxu0 0.0
  %197 = vmatprep.subr.mxu0 0.0
  %198 = vmatpush1.msra.mxu0 0.0
  %199 = vmatprep.subr.mxu0 0.0
  %200 = vmatpush1.msra.mxu0 0.0
  %201 = vmatprep.subr.mxu0 0.0
  %202 = vmatpush1.msra.mxu0 0.0
  %203 = vmatprep.subr.mxu0 0.0
  %204 = vmatpush1.msra.mxu0 0.0
  %205 = vmatprep.subr.mxu0 0.0
  %206 = vmatpush1.msra.mxu0 0.0
  %207 = vmatprep.subr.mxu0 0.0
  %208 = vmatpush1.msra.mxu0 0.0
  %209 = vmatprep.subr.mxu0 0.0
  %210 = vmatpush1.msra.mxu0 0.0
  %211 = vmatprep.subr.mxu0 0.0
  %212 = vmatpush1.msra.mxu0 0.0
  %213 = vmatprep.subr.mxu0 0.0
  %214 = vmatpush1.msra.mxu0 0.0
  %215 = vmatprep.subr.mxu0 0.0
  %216 = vmatpush1.msra.mxu0 0.0
  %217 = vmatprep.subr.mxu0 0.0
  %218 = vmatpush1.msra.mxu0 0.0
  %219 = vmatprep.subr.mxu0 0.0
  %220 = vmatpush1.msra.mxu0 0.0
  %221 = vmatprep.subr.mxu0 0.0
  %222 = vmatpush1.msra.mxu0 0.0
  %223 = vmatprep.subr.mxu0 0.0
  %224 = vmatpush1.msra.mxu0 0.0
  %225 = vmatprep.mubr.f32.mxu0 0.0
  %226 = vmatmul.mubr.f32.gmra.mrb[0].mxu0 %v160
  %v227 = vpop.f32.mrb[0].mxu0
  %v228 = vadd.f32 %v74, %v227
  %v229 = vpop.f32.mrb[0].mxu0
  %230 = vdwg.mxu0
  %v231 = vtanh.pop %v228
  %v232 = vsub.f32 1.0, %v152
  %v233 = vmul.f32 %v232, %v71
  %v234 = vmul.f32 %v152, %v231
  %v235 = vadd.f32 %v233, %v234
  %236 = vst [vmem:[%s4] sm:$0xff] %v235
  %s237 = scalar_lea.vmem %s0, 24
  %v238 = vld [vmem:[%s237] sm:$0xff]
  %v239 = vld [vmem:[%s237 + $0x8] sm:$0xff]
  %v240 = vld [vmem:[%s237 + $0x10] sm:$0xff]
  %241 = vmatprep.subr.mxu0 %v24
  %242 = vmatpush1.msra.mxu0 %v23
  %243 = vmatprep.subr.mxu0 %v26
  %244 = vmatpush1.msra.mxu0 %v25
  %245 = vmatprep.subr.mxu0 %v28
  %246 = vmatpush1.msra.mxu0 %v27
  %247 = vmatprep.subr.mxu0 %v30
  %248 = vmatpush1.msra.mxu0 %v29
  %249 = vmatprep.subr.mxu0 %v32
  %250 = vmatpush1.msra.mxu0 %v31
  %251 = vmatprep.subr.mxu0 %v34
  %252 = vmatpush1.msra.mxu0 %v33
  %253 = vmatprep.subr.mxu0 %v36
  %254 = vmatpush1.msra.mxu0 %v35
  %255 = vmatprep.subr.mxu0 %v38
  %256 = vmatpush1.msra.mxu0 %v37
  %257 = vmatprep.subr.mxu0 %v40
  %258 = vmatpush1.msra.mxu0 %v39
  %259 = vmatprep.subr.mxu0 %v42
  %260 = vmatpush1.msra.mxu0 %v41
  %261 = vmatprep.subr.mxu0 %v44
  %262 = vmatpush1.msra.mxu0 %v43
  %263 = vmatprep.subr.mxu0 %v46
  %264 = vmatpush1.msra.mxu0 %v45
  %265 = vmatprep.subr.mxu0 %v48
  %266 = vmatpush1.msra.mxu0 %v47
  %267 = vmatprep.subr.mxu0 %v50
  %268 = vmatpush1.msra.mxu0 %v49
  %269 = vmatprep.subr.mxu0 %v52
  %270 = vmatpush1.msra.mxu0 %v51
  %271 = vmatprep.subr.mxu0 %v54
  %272 = vmatpush1.msra.mxu0 %v53
  %273 = vmatprep.subr.mxu0 0.0
  %274 = vmatpush1.msra.mxu0 0.0
  %275 = vmatprep.subr.mxu0 0.0
  %276 = vmatpush1.msra.mxu0 0.0
  %277 = vmatprep.subr.mxu0 0.0
  %278 = vmatpush1.msra.mxu0 0.0
  %279 = vmatprep.subr.mxu0 0.0
  %280 = vmatpush1.msra.mxu0 0.0
  %281 = vmatprep.subr.mxu0 0.0
  %282 = vmatpush1.msra.mxu0 0.0
  %283 = vmatprep.subr.mxu0 0.0
  %284 = vmatpush1.msra.mxu0 0.0
  %285 = vmatprep.subr.mxu0 0.0
  %286 = vmatpush1.msra.mxu0 0.0
  %287 = vmatprep.subr.mxu0 0.0
  %288 = vmatpush1.msra.mxu0 0.0
  %289 = vmatprep.subr.mxu0 0.0
  %290 = vmatpush1.msra.mxu0 0.0
  %291 = vmatprep.subr.mxu0 0.0
  %292 = vmatpush1.msra.mxu0 0.0
  %293 = vmatprep.subr.mxu0 0.0
  %294 = vmatpush1.msra.mxu0 0.0
  %295 = vmatprep.subr.mxu0 0.0
  %296 = vmatpush1.msra.mxu0 0.0
  %297 = vmatprep.subr.mxu0 0.0
  %298 = vmatpush1.msra.mxu0 0.0
  %299 = vmatprep.subr.mxu0 0.0
  %300 = vmatpush1.msra.mxu0 0.0
  %301 = vmatprep.subr.mxu0 0.0
  %302 = vmatpush1.msra.mxu0 0.0
  %303 = vmatprep.subr.mxu0 0.0
  %304 = vmatpush1.msra.mxu0 0.0
  %305 = vmatprep.mubr.f32.mxu0 0.0
  %306 = vmatmul.mubr.f32.gmra.mrb[0].mxu0 %v235
  %v307 = vpop.f32.mrb[0].mxu0
  %v308 = vadd.f32 0.0, %v307
  %v309 = vpop.f32.mrb[0].mxu0
  %v310 = vadd.f32 0.0, %v309
  %311 = vdwg.mxu0
  %v312 = vadd.f32 %v308, %v238
  %v313 = vxor.u32 %v312, 2147483648
  %v314 = vmul.f32 %v313, 1.442695
  %v315 = vpow.pop %v314
  %v316 = vadd.f32 %v315, 1.0
  %v317 = vrcp.pop %v316
  %v318 = vmul.f32 1.0, %v317
  %v319 = vadd.f32 %v310, %v239
  %v320 = vxor.u32 %v319, 2147483648
  %v321 = vmul.f32 %v320, 1.442695
  %v322 = vpow.pop %v321
  %v323 = vadd.f32 %v322, 1.0
  %v324 = vrcp.pop %v323
  %v325 = vmul.f32 1.0, %v324
  %v326 = vmul.f32 %v325, %v235
  %327 = vmatprep.subr.mxu0 0.0
  %328 = vmatpush1.msra.mxu0 %v55
  %329 = vmatprep.subr.mxu0 0.0
  %330 = vmatpush1.msra.mxu0 %v56
  %331 = vmatprep.subr.mxu0 0.0
  %332 = vmatpush1.msra.mxu0 %v57
  %333 = vmatprep.subr.mxu0 0.0
  %334 = vmatpush1.msra.mxu0 %v58
  %335 = vmatprep.subr.mxu0 0.0
  %336 = vmatpush1.msra.mxu0 %v59
  %337 = vmatprep.subr.mxu0 0.0
  %338 = vmatpush1.msra.mxu0 %v60
  %339 = vmatprep.subr.mxu0 0.0
  %340 = vmatpush1.msra.mxu0 %v61
  %341 = vmatprep.subr.mxu0 0.0
  %342 = vmatpush1.msra.mxu0 %v62
  %343 = vmatprep.subr.mxu0 0.0
  %344 = vmatpush1.msra.mxu0 %v63
  %345 = vmatprep.subr.mxu0 0.0
  %346 = vmatpush1.msra.mxu0 %v64
  %347 = vmatprep.subr.mxu0 0.0
  %348 = vmatpush1.msra.mxu0 %v65
  %349 = vmatprep.subr.mxu0 0.0
  %350 = vmatpush1.msra.mxu0 %v66
  %351 = vmatprep.subr.mxu0 0.0
  %352 = vmatpush1.msra.mxu0 %v67
  %353 = vmatprep.subr.mxu0 0.0
  %354 = vmatpush1.msra.mxu0 %v68
  %355 = vmatprep.subr.mxu0 0.0
  %356 = vmatpush1.msra.mxu0 %v69
  %357 = vmatprep.subr.mxu0 0.0
  %358 = vmatpush1.msra.mxu0 %v70
  %359 = vmatprep.subr.mxu0 0.0
  %360 = vmatpush1.msra.mxu0 0.0
  %361 = vmatprep.subr.mxu0 0.0
  %362 = vmatpush1.msra.mxu0 0.0
  %363 = vmatprep.subr.mxu0 0.0
  %364 = vmatpush1.msra.mxu0 0.0
  %365 = vmatprep.subr.mxu0 0.0
  %366 = vmatpush1.msra.mxu0 0.0
  %367 = vmatprep.subr.mxu0 0.0
  %368 = vmatpush1.msra.mxu0 0.0
  %369 = vmatprep.subr.mxu0 0.0
  %370 = vmatpush1.msra.mxu0 0.0
  %371 = vmatprep.subr.mxu0 0.0
  %372 = vmatpush1.msra.mxu0 0.0
  %373 = vmatprep.subr.mxu0 0.0
  %374 = vmatpush1.msra.mxu0 0.0
  %375 = vmatprep.subr.mxu0 0.0
  %376 = vmatpush1.msra.mxu0 0.0
  %377 = vmatprep.subr.mxu0 0.0
  %378 = vmatpush1.msra.mxu0 0.0
  %379 = vmatprep.subr.mxu0 0.0
  %380 = vmatpush1.msra.mxu0 0.0
  %381 = vmatprep.subr.mxu0 0.0
  %382 = vmatpush1.msra.mxu0 0.0
  %383 = vmatprep.subr.mxu0 0.0
  %384 = vmatpush1.msra.mxu0 0.0
  %385 = vmatprep.subr.mxu0 0.0
  %386 = vmatpush1.msra.mxu0 0.0
  %387 = vmatprep.subr.mxu0 0.0
  %388 = vmatpush1.msra.mxu0 0.0
  %389 = vmatprep.subr.mxu0 0.0
  %390 = vmatpush1.msra.mxu0 0.0
  %391 = vmatprep.mubr.f32.mxu0 0.0
  %392 = vmatmul.mubr.f32.gmra.mrb[0].mxu0 %v326
  %v393 = vpop.f32.mrb[0].mxu0
  %v394 = vadd.f32 %v240, %v393
  %v395 = vpop.f32.mrb[0].mxu0
  %396 = vdwg.mxu0
  %v397 = vtanh.pop %v394
  %v398 = vsub.f32 1.0, %v318
  %v399 = vmul.f32 %v398, %v235
  %v400 = vmul.f32 %v318, %v397
  %v401 = vadd.f32 %v399, %v400
  %s402 = scalar_lea.vmem %s4, 8
  %403 = vst [vmem:[%s402] sm:$0xff] %v401
  %s404 = scalar_lea.vmem %s0, 48
  %v405 = vld [vmem:[%s404] sm:$0xff]
  %v406 = vld [vmem:[%s404 + $0x8] sm:$0xff]
  %v407 = vld [vmem:[%s404 + $0x10] sm:$0xff]
  %408 = vmatprep.subr.mxu0 %v24
  %409 = vmatpush1.msra.mxu0 %v23
  %410 = vmatprep.subr.mxu0 %v26
  %411 = vmatpush1.msra.mxu0 %v25
  %412 = vmatprep.subr.mxu0 %v28
  %413 = vmatpush1.msra.mxu0 %v27
  %414 = vmatprep.subr.mxu0 %v30
  %415 = vmatpush1.msra.mxu0 %v29
  %416 = vmatprep.subr.mxu0 %v32
  %417 = vmatpush1.msra.mxu0 %v31
  %418 = vmatprep.subr.mxu0 %v34
  %419 = vmatpush1.msra.mxu0 %v33
  %420 = vmatprep.subr.mxu0 %v36
  %421 = vmatpush1.msra.mxu0 %v35
  %422 = vmatprep.subr.mxu0 %v38
  %423 = vmatpush1.msra.mxu0 %v37
  %424 = vmatprep.subr.mxu0 %v40
  %425 = vmatpush1.msra.mxu0 %v39
  %426 = vmatprep.subr.mxu0 %v42
  %427 = vmatpush1.msra.mxu0 %v41
  %428 = vmatprep.subr.mxu0 %v44
  %429 = vmatpush1.msra.mxu0 %v43
  %430 = vmatprep.subr.mxu0 %v46
  %431 = vmatpush1.msra.mxu0 %v45
  %432 = vmatprep.subr.mxu0 %v48
  %433 = vmatpush1.msra.mxu0 %v47
  %434 = vmatprep.subr.mxu0 %v50
  %435 = vmatpush1.msra.mxu0 %v49
  %436 = vmatprep.subr.mxu0 %v52
  %437 = vmatpush1.msra.mxu0 %v51
  %438 = vmatprep.subr.mxu0 %v54
  %439 = vmatpush1.msra.mxu0 %v53
  %440 = vmatprep.subr.mxu0 0.0
  %441 = vmatpush1.msra.mxu0 0.0
  %442 = vmatprep.subr.mxu0 0.0
  %443 = vmatpush1.msra.mxu0 0.0
  %444 = vmatprep.subr.mxu0 0.0
  %445 = vmatpush1.msra.mxu0 0.0
  %446 = vmatprep.subr.mxu0 0.0
  %447 = vmatpush1.msra.mxu0 0.0
  %448 = vmatprep.subr.mxu0 0.0
  %449 = vmatpush1.msra.mxu0 0.0
  %450 = vmatprep.subr.mxu0 0.0
  %451 = vmatpush1.msra.mxu0 0.0
  %452 = vmatprep.subr.mxu0 0.0
  %453 = vmatpush1.msra.mxu0 0.0
  %454 = vmatprep.subr.mxu0 0.0
  %455 = vmatpush1.msra.mxu0 0.0
  %456 = vmatprep.subr.mxu0 0.0
  %457 = vmatpush1.msra.mxu0 0.0
  %458 = vmatprep.subr.mxu0 0.0
  %459 = vmatpush1.msra.mxu0 0.0
  %460 = vmatprep.subr.mxu0 0.0
  %461 = vmatpush1.msra.mxu0 0.0
  %462 = vmatprep.subr.mxu0 0.0
  %463 = vmatpush1.msra.mxu0 0.0
  %464 = vmatprep.subr.mxu0 0.0
  %465 = vmatpush1.msra.mxu0 0.0
  %466 = vmatprep.subr.mxu0 0.0
  %467 = vmatpush1.msra.mxu0 0.0
  %468 = vmatprep.subr.mxu0 0.0
  %469 = vmatpush1.msra.mxu0 0.0
  %470 = vmatprep.subr.mxu0 0.0
  %471 = vmatpush1.msra.mxu0 0.0
  %472 = vmatprep.mubr.f32.mxu0 0.0
  %473 = vmatmul.mubr.f32.gmra.mrb[0].mxu0 %v401
  %v474 = vpop.f32.mrb[0].mxu0
  %v475 = vadd.f32 0.0, %v474
  %v476 = vpop.f32.mrb[0].mxu0
  %v477 = vadd.f32 0.0, %v476
  %478 = vdwg.mxu0
  %v479 = vadd.f32 %v475, %v405
  %v480 = vxor.u32 %v479, 2147483648
  %v481 = vmul.f32 %v480, 1.442695
  %v482 = vpow.pop %v481
  %v483 = vadd.f32 %v482, 1.0
  %v484 = vrcp.pop %v483
  %v485 = vmul.f32 1.0, %v484
  %v486 = vadd.f32 %v477, %v406
  %v487 = vxor.u32 %v486, 2147483648
  %v488 = vmul.f32 %v487, 1.442695
  %v489 = vpow.pop %v488
  %v490 = vadd.f32 %v489, 1.0
  %v491 = vrcp.pop %v490
  %v492 = vmul.f32 1.0, %v491
  %v493 = vmul.f32 %v492, %v401
  %494 = vmatprep.subr.mxu0 0.0
  %495 = vmatpush1.msra.mxu0 %v55
  %496 = vmatprep.subr.mxu0 0.0
  %497 = vmatpush1.msra.mxu0 %v56
  %498 = vmatprep.subr.mxu0 0.0
  %499 = vmatpush1.msra.mxu0 %v57
  %500 = vmatprep.subr.mxu0 0.0
  %501 = vmatpush1.msra.mxu0 %v58
  %502 = vmatprep.subr.mxu0 0.0
  %503 = vmatpush1.msra.mxu0 %v59
  %504 = vmatprep.subr.mxu0 0.0
  %505 = vmatpush1.msra.mxu0 %v60
  %506 = vmatprep.subr.mxu0 0.0
  %507 = vmatpush1.msra.mxu0 %v61
  %508 = vmatprep.subr.mxu0 0.0
  %509 = vmatpush1.msra.mxu0 %v62
  %510 = vmatprep.subr.mxu0 0.0
  %511 = vmatpush1.msra.mxu0 %v63
  %512 = vmatprep.subr.mxu0 0.0
  %513 = vmatpush1.msra.mxu0 %v64
  %514 = vmatprep.subr.mxu0 0.0
  %515 = vmatpush1.msra.mxu0 %v65
  %516 = vmatprep.subr.mxu0 0.0
  %517 = vmatpush1.msra.mxu0 %v66
  %518 = vmatprep.subr.mxu0 0.0
  %519 = vmatpush1.msra.mxu0 %v67
  %520 = vmatprep.subr.mxu0 0.0
  %521 = vmatpush1.msra.mxu0 %v68
  %522 = vmatprep.subr.mxu0 0.0
  %523 = vmatpush1.msra.mxu0 %v69
  %524 = vmatprep.subr.mxu0 0.0
  %525 = vmatpush1.msra.mxu0 %v70
  %526 = vmatprep.subr.mxu0 0.0
  %527 = vmatpush1.msra.mxu0 0.0
  %528 = vmatprep.subr.mxu0 0.0
  %529 = vmatpush1.msra.mxu0 0.0
  %530 = vmatprep.subr.mxu0 0.0
  %531 = vmatpush1.msra.mxu0 0.0
  %532 = vmatprep.subr.mxu0 0.0
  %533 = vmatpush1.msra.mxu0 0.0
  %534 = vmatprep.subr.mxu0 0.0
  %535 = vmatpush1.msra.mxu0 0.0
  %536 = vmatprep.subr.mxu0 0.0
  %537 = vmatpush1.msra.mxu0 0.0
  %538 = vmatprep.subr.mxu0 0.0
  %539 = vmatpush1.msra.mxu0 0.0
  %540 = vmatprep.subr.mxu0 0.0
  %541 = vmatpush1.msra.mxu0 0.0
  %542 = vmatprep.subr.mxu0 0.0
  %543 = vmatpush1.msra.mxu0 0.0
  %544 = vmatprep.subr.mxu0 0.0
  %545 = vmatpush1.msra.mxu0 0.0
  %546 = vmatprep.subr.mxu0 0.0
  %547 = vmatpush1.msra.mxu0 0.0
  %548 = vmatprep.subr.mxu0 0.0
  %549 = vmatpush1.msra.mxu0 0.0
  %550 = vmatprep.subr.mxu0 0.0
  %551 = vmatpush1.msra.mxu0 0.0
  %552 = vmatprep.subr.mxu0 0.0
  %553 = vmatpush1.msra.mxu0 0.0
  %554 = vmatprep.subr.mxu0 0.0
  %555 = vmatpush1.msra.mxu0 0.0
  %556 = vmatprep.subr.mxu0 0.0
  %557 = vmatpush1.msra.mxu0 0.0
  %558 = vmatprep.mubr.f32.mxu0 0.0
  %559 = vmatmul.mubr.f32.gmra.mrb[0].mxu0 %v493
  %v560 = vpop.f32.mrb[0].mxu0
  %v561 = vadd.f32 %v407, %v560
  %v562 = vpop.f32.mrb[0].mxu0
  %563 = vdwg.mxu0
  %v564 = vtanh.pop %v561
  %v565 = vsub.f32 1.0, %v485
  %v566 = vmul.f32 %v565, %v401
  %v567 = vmul.f32 %v485, %v564
  %v568 = vadd.f32 %v566, %v567
  %s569 = scalar_lea.vmem %s4, 16
  %570 = vst [vmem:[%s569] sm:$0xff] %v568
  %s571 = scalar_lea.vmem %s0, 72
  %v572 = vld [vmem:[%s571] sm:$0xff]
  %v573 = vld [vmem:[%s571 + $0x8] sm:$0xff]
  %v574 = vld [vmem:[%s571 + $0x10] sm:$0xff]
  %575 = vmatprep.subr.mxu0 %v24
  %576 = vmatpush1.msra.mxu0 %v23
  %577 = vmatprep.subr.mxu0 %v26
  %578 = vmatpush1.msra.mxu0 %v25
  %579 = vmatprep.subr.mxu0 %v28
  %580 = vmatpush1.msra.mxu0 %v27
  %581 = vmatprep.subr.mxu0 %v30
  %582 = vmatpush1.msra.mxu0 %v29
  %583 = vmatprep.subr.mxu0 %v32
  %584 = vmatpush1.msra.mxu0 %v31
  %585 = vmatprep.subr.mxu0 %v34
  %586 = vmatpush1.msra.mxu0 %v33
  %587 = vmatprep.subr.mxu0 %v36
  %588 = vmatpush1.msra.mxu0 %v35
  %589 = vmatprep.subr.mxu0 %v38
  %590 = vmatpush1.msra.mxu0 %v37
  %591 = vmatprep.subr.mxu0 %v40
  %592 = vmatpush1.msra.mxu0 %v39
  %593 = vmatprep.subr.mxu0 %v42
  %594 = vmatpush1.msra.mxu0 %v41
  %595 = vmatprep.subr.mxu0 %v44
  %596 = vmatpush1.msra.mxu0 %v43
  %597 = vmatprep.subr.mxu0 %v46
  %598 = vmatpush1.msra.mxu0 %v45
  %599 = vmatprep.subr.mxu0 %v48
  %600 = vmatpush1.msra.mxu0 %v47
  %601 = vmatprep.subr.mxu0 %v50
  %602 = vmatpush1.msra.mxu0 %v49
  %603 = vmatprep.subr.mxu0 %v52
  %604 = vmatpush1.msra.mxu0 %v51
  %605 = vmatprep.subr.mxu0 %v54
  %606 = vmatpush1.msra.mxu0 %v53
  %607 = vmatprep.subr.mxu0 0.0
  %608 = vmatpush1.msra.mxu0 0.0
  %609 = vmatprep.subr.mxu0 0.0
  %610 = vmatpush1.msra.mxu0 0.0
  %611 = vmatprep.subr.mxu0 0.0
  %612 = vmatpush1.msra.mxu0 0.0
  %613 = vmatprep.subr.mxu0 0.0
  %614 = vmatpush1.msra.mxu0 0.0
  %615 = vmatprep.subr.mxu0 0.0
  %616 = vmatpush1.msra.mxu0 0.0
  %617 = vmatprep.subr.mxu0 0.0
  %618 = vmatpush1.msra.mxu0 0.0
  %619 = vmatprep.subr.mxu0 0.0
  %620 = vmatpush1.msra.mxu0 0.0
  %621 = vmatprep.subr.mxu0 0.0
  %622 = vmatpush1.msra.mxu0 0.0
  %623 = vmatprep.subr.mxu0 0.0
  %624 = vmatpush1.msra.mxu0 0.0
  %625 = vmatprep.subr.mxu0 0.0
  %626 = vmatpush1.msra.mxu0 0.0
  %627 = vmatprep.subr.mxu0 0.0
  %628 = vmatpush1.msra.mxu0 0.0
  %629 = vmatprep.subr.mxu0 0.0
  %630 = vmatpush1.msra.mxu0 0.0
  %631 = vmatprep.subr.mxu0 0.0
  %632 = vmatpush1.msra.mxu0 0.0
  %633 = vmatprep.subr.mxu0 0.0
  %634 = vmatpush1.msra.mxu0 0.0
  %635 = vmatprep.subr.mxu0 0.0
  %636 = vmatpush1.msra.mxu0 0.0
  %637 = vmatprep.subr.mxu0 0.0
  %638 = vmatpush1.msra.mxu0 0.0
  %639 = vmatprep.mubr.f32.mxu0 0.0
  %640 = vmatmul.mubr.f32.gmra.mrb[0].mxu0 %v568
  %v641 = vpop.f32.mrb[0].mxu0
  %v642 = vadd.f32 0.0, %v641
  %v643 = vpop.f32.mrb[0].mxu0
  %v644 = vadd.f32 0.0, %v643
  %645 = vdwg.mxu0
  %v646 = vadd.f32 %v642, %v572
  %v647 = vxor.u32 %v646, 2147483648
  %v648 = vmul.f32 %v647, 1.442695
  %v649 = vpow.pop %v648
  %v650 = vadd.f32 %v649, 1.0
  %v651 = vrcp.pop %v650
  %v652 = vmul.f32 1.0, %v651
  %v653 = vadd.f32 %v644, %v573
  %v654 = vxor.u32 %v653, 2147483648
  %v655 = vmul.f32 %v654, 1.442695
  %v656 = vpow.pop %v655
  %v657 = vadd.f32 %v656, 1.0
  %v658 = vrcp.pop %v657
  %v659 = vmul.f32 1.0, %v658
  %v660 = vmul.f32 %v659, %v568
  %661 = vmatprep.subr.mxu0 0.0
  %662 = vmatpush1.msra.mxu0 %v55
  %663 = vmatprep.subr.mxu0 0.0
  %664 = vmatpush1.msra.mxu0 %v56
  %665 = vmatprep.subr.mxu0 0.0
  %666 = vmatpush1.msra.mxu0 %v57
  %667 = vmatprep.subr.mxu0 0.0
  %668 = vmatpush1.msra.mxu0 %v58
  %669 = vmatprep.subr.mxu0 0.0
  %670 = vmatpush1.msra.mxu0 %v59
  %671 = vmatprep.subr.mxu0 0.0
  %672 = vmatpush1.msra.mxu0 %v60
  %673 = vmatprep.subr.mxu0 0.0
  %674 = vmatpush1.msra.mxu0 %v61
  %675 = vmatprep.subr.mxu0 0.0
  %676 = vmatpush1.msra.mxu0 %v62
  %677 = vmatprep.subr.mxu0 0.0
  %678 = vmatpush1.msra.mxu0 %v63
  %679 = vmatprep.subr.mxu0 0.0
  %680 = vmatpush1.msra.mxu0 %v64
  %681 = vmatprep.subr.mxu0 0.0
  %682 = vmatpush1.msra.mxu0 %v65
  %683 = vmatprep.subr.mxu0 0.0
  %684 = vmatpush1.msra.mxu0 %v66
  %685 = vmatprep.subr.mxu0 0.0
  %686 = vmatpush1.msra.mxu0 %v67
  %687 = vmatprep.subr.mxu0 0.0
  %688 = vmatpush1.msra.mxu0 %v68
  %689 = vmatprep.subr.mxu0 0.0
  %690 = vmatpush1.msra.mxu0 %v69
  %691 = vmatprep.subr.mxu0 0.0
  %692 = vmatpush1.msra.mxu0 %v70
  %693 = vmatprep.subr.mxu0 0.0
  %694 = vmatpush1.msra.mxu0 0.0
  %695 = vmatprep.subr.mxu0 0.0
  %696 = vmatpush1.msra.mxu0 0.0
  %697 = vmatprep.subr.mxu0 0.0
  %698 = vmatpush1.msra.mxu0 0.0
  %699 = vmatprep.subr.mxu0 0.0
  %700 = vmatpush1.msra.mxu0 0.0
  %701 = vmatprep.subr.mxu0 0.0
  %702 = vmatpush1.msra.mxu0 0.0
  %703 = vmatprep.subr.mxu0 0.0
  %704 = vmatpush1.msra.mxu0 0.0
  %705 = vmatprep.subr.mxu0 0.0
  %706 = vmatpush1.msra.mxu0 0.0
  %707 = vmatprep.subr.mxu0 0.0
  %708 = vmatpush1.msra.mxu0 0.0
  %709 = vmatprep.subr.mxu0 0.0
  %710 = vmatpush1.msra.mxu0 0.0
  %711 = vmatprep.subr.mxu0 0.0
  %712 = vmatpush1.msra.mxu0 0.0
  %713 = vmatprep.subr.mxu0 0.0
  %714 = vmatpush1.msra.mxu0 0.0
  %715 = vmatprep.subr.mxu0 0.0
  %716 = vmatpush1.msra.mxu0 0.0
  %717 = vmatprep.subr.mxu0 0.0
  %718 = vmatpush1.msra.mxu0 0.0
  %719 = vmatprep.subr.mxu0 0.0
  %720 = vmatpush1.msra.mxu0 0.0
  %721 = vmatprep.subr.mxu0 0.0
  %722 = vmatpush1.msra.mxu0 0.0
  %723 = vmatprep.subr.mxu0 0.0
  %724 = vmatpush1.msra.mxu0 0.0
  %725 = vmatprep.mubr.f32.mxu0 0.0
  %726 = vmatmul.mubr.f32.gmra.mrb[0].mxu0 %v660
  %v727 = vpop.f32.mrb[0].mxu0
  %v728 = vadd.f32 %v574, %v727
  %v729 = vpop.f32.mrb[0].mxu0
  %730 = vdwg.mxu0
  %v731 = vtanh.pop %v728
  %v732 = vsub.f32 1.0, %v652
  %v733 = vmul.f32 %v732, %v568
  %v734 = vmul.f32 %v652, %v731
  %v735 = vadd.f32 %v733, %v734
  %s736 = scalar_lea.vmem %s4, 24
  %737 = vst [vmem:[%s736] sm:$0xff] %v735
  %s738 = scalar_lea.vmem %s0, 96
  %v739 = vld [vmem:[%s738] sm:$0xff]
  %v740 = vld [vmem:[%s738 + $0x8] sm:$0xff]
  %v741 = vld [vmem:[%s738 + $0x10] sm:$0xff]
  %742 = vmatprep.subr.mxu0 %v24
  %743 = vmatpush1.msra.mxu0 %v23
  %744 = vmatprep.subr.mxu0 %v26
  %745 = vmatpush1.msra.mxu0 %v25
  %746 = vmatprep.subr.mxu0 %v28
  %747 = vmatpush1.msra.mxu0 %v27
  %748 = vmatprep.subr.mxu0 %v30
  %749 = vmatpush1.msra.mxu0 %v29
  %750 = vmatprep.subr.mxu0 %v32
  %751 = vmatpush1.msra.mxu0 %v31
  %752 = vmatprep.subr.mxu0 %v34
  %753 = vmatpush1.msra.mxu0 %v33
  %754 = vmatprep.subr.mxu0 %v36
  %755 = vmatpush1.msra.mxu0 %v35
  %756 = vmatprep.subr.mxu0 %v38
  %757 = vmatpush1.msra.mxu0 %v37
  %758 = vmatprep.subr.mxu0 %v40
  %759 = vmatpush1.msra.mxu0 %v39
  %760 = vmatprep.subr.mxu0 %v42
  %761 = vmatpush1.msra.mxu0 %v41
  %762 = vmatprep.subr.mxu0 %v44
  %763 = vmatpush1.msra.mxu0 %v43
  %764 = vmatprep.subr.mxu0 %v46
  %765 = vmatpush1.msra.mxu0 %v45
  %766 = vmatprep.subr.mxu0 %v48
  %767 = vmatpush1.msra.mxu0 %v47
  %768 = vmatprep.subr.mxu0 %v50
  %769 = vmatpush1.msra.mxu0 %v49
  %770 = vmatprep.subr.mxu0 %v52
  %771 = vmatpush1.msra.mxu0 %v51
  %772 = vmatprep.subr.mxu0 %v54
  %773 = vmatpush1.msra.mxu0 %v53
  %774 = vmatprep.subr.mxu0 0.0
  %775 = vmatpush1.msra.mxu0 0.0
  %776 = vmatprep.subr.mxu0 0.0
  %777 = vmatpush1.msra.mxu0 0.0
  %778 = vmatprep.subr.mxu0 0.0
  %779 = vmatpush1.msra.mxu0 0.0
  %780 = vmatprep.subr.mxu0 0.0
  %781 = vmatpush1.msra.mxu0 0.0
  %782 = vmatprep.subr.mxu0 0.0
  %783 = vmatpush1.msra.mxu0 0.0
  %784 = vmatprep.subr.mxu0 0.0
  %785 = vmatpush1.msra.mxu0 0.0
  %786 = vmatprep.subr.mxu0 0.0
  %787 = vmatpush1.msra.mxu0 0.0
  %788 = vmatprep.subr.mxu0 0.0
  %789 = vmatpush1.msra.mxu0 0.0
  %790 = vmatprep.subr.mxu0 0.0
  %791 = vmatpush1.msra.mxu0 0.0
  %792 = vmatprep.subr.mxu0 0.0
  %793 = vmatpush1.msra.mxu0 0.0
  %794 = vmatprep.subr.mxu0 0.0
  %795 = vmatpush1.msra.mxu0 0.0
  %796 = vmatprep.subr.mxu0 0.0
  %797 = vmatpush1.msra.mxu0 0.0
  %798 = vmatprep.subr.mxu0 0.0
  %799 = vmatpush1.msra.mxu0 0.0
  %800 = vmatprep.subr.mxu0 0.0
  %801 = vmatpush1.msra.mxu0 0.0
  %802 = vmatprep.subr.mxu0 0.0
  %803 = vmatpush1.msra.mxu0 0.0
  %804 = vmatprep.subr.mxu0 0.0
  %805 = vmatpush1.msra.mxu0 0.0
  %806 = vmatprep.mubr.f32.mxu0 0.0
  %807 = vmatmul.mubr.f32.gmra.mrb[0].mxu0 %v735
  %v808 = vpop.f32.mrb[0].mxu0
  %v809 = vadd.f32 0.0, %v808
  %v810 = vpop.f32.mrb[0].mxu0
  %v811 = vadd.f32 0.0, %v810
  %812 = vdwg.mxu0
  %v813 = vadd.f32 %v809, %v739
  %v814 = vxor.u32 %v813, 2147483648
  %v815 = vmul.f32 %v814, 1.442695
  %v816 = vpow.pop %v815
  %v817 = vadd.f32 %v816, 1.0
  %v818 = vrcp.pop %v817
  %v819 = vmul.f32 1.0, %v818
  %v820 = vadd.f32 %v811, %v740
  %v821 = vxor.u32 %v820, 2147483648
  %v822 = vmul.f32 %v821, 1.442695
  %v823 = vpow.pop %v822
  %v824 = vadd.f32 %v823, 1.0
  %v825 = vrcp.pop %v824
  %v826 = vmul.f32 1.0, %v825
  %v827 = vmul.f32 %v826, %v735
  %828 = vmatprep.subr.mxu0 0.0
  %829 = vmatpush1.msra.mxu0 %v55
  %830 = vmatprep.subr.mxu0 0.0
  %831 = vmatpush1.msra.mxu0 %v56
  %832 = vmatprep.subr.mxu0 0.0
  %833 = vmatpush1.msra.mxu0 %v57
  %834 = vmatprep.subr.mxu0 0.0
  %835 = vmatpush1.msra.mxu0 %v58
  %836 = vmatprep.subr.mxu0 0.0
  %837 = vmatpush1.msra.mxu0 %v59
  %838 = vmatprep.subr.mxu0 0.0
  %839 = vmatpush1.msra.mxu0 %v60
  %840 = vmatprep.subr.mxu0 0.0
  %841 = vmatpush1.msra.mxu0 %v61
  %842 = vmatprep.subr.mxu0 0.0
  %843 = vmatpush1.msra.mxu0 %v62
  %844 = vmatprep.subr.mxu0 0.0
  %845 = vmatpush1.msra.mxu0 %v63
  %846 = vmatprep.subr.mxu0 0.0
  %847 = vmatpush1.msra.mxu0 %v64
  %848 = vmatprep.subr.mxu0 0.0
  %849 = vmatpush1.msra.mxu0 %v65
  %850 = vmatprep.subr.mxu0 0.0
  %851 = vmatpush1.msra.mxu0 %v66
  %852 = vmatprep.subr.mxu0 0.0
  %853 = vmatpush1.msra.mxu0 %v67
  %854 = vmatprep.subr.mxu0 0.0
  %855 = vmatpush1.msra.mxu0 %v68
  %856 = vmatprep.subr.mxu0 0.0
  %857 = vmatpush1.msra.mxu0 %v69
  %858 = vmatprep.subr.mxu0 0.0
  %859 = vmatpush1.msra.mxu0 %v70
  %860 = vmatprep.subr.mxu0 0.0
  %861 = vmatpush1.msra.mxu0 0.0
  %862 = vmatprep.subr.mxu0 0.0
  %863 = vmatpush1.msra.mxu0 0.0
  %864 = vmatprep.subr.mxu0 0.0
  %865 = vmatpush1.msra.mxu0 0.0
  %866 = vmatprep.subr.mxu0 0.0
  %867 = vmatpush1.msra.mxu0 0.0
  %868 = vmatprep.subr.mxu0 0.0
  %869 = vmatpush1.msra.mxu0 0.0
  %870 = vmatprep.subr.mxu0 0.0
  %871 = vmatpush1.msra.mxu0 0.0
  %872 = vmatprep.subr.mxu0 0.0
  %873 = vmatpush1.msra.mxu0 0.0
  %874 = vmatprep.subr.mxu0 0.0
  %875 = vmatpush1.msra.mxu0 0.0
  %876 = vmatprep.subr.mxu0 0.0
  %877 = vmatpush1.msra.mxu0 0.0
  %878 = vmatprep.subr.mxu0 0.0
  %879 = vmatpush1.msra.mxu0 0.0
  %880 = vmatprep.subr.mxu0 0.0
  %881 = vmatpush1.msra.mxu0 0.0
  %882 = vmatprep.subr.mxu0 0.0
  %883 = vmatpush1.msra.mxu0 0.0
  %884 = vmatprep.subr.mxu0 0.0
  %885 = vmatpush1.msra.mxu0 0.0
  %886 = vmatprep.subr.mxu0 0.0
  %887 = vmatpush1.msra.mxu0 0.0
  %888 = vmatprep.subr.mxu0 0.0
  %889 = vmatpush1.msra.mxu0 0.0
  %890 = vmatprep.subr.mxu0 0.0
  %891 = vmatpush1.msra.mxu0 0.0
  %892 = vmatprep.mubr.f32.mxu0 0.0
  %893 = vmatmul.mubr.f32.gmra.mrb[0].mxu0 %v827
  %v894 = vpop.f32.mrb[0].mxu0
  %v895 = vadd.f32 %v741, %v894
  %v896 = vpop.f32.mrb[0].mxu0
  %897 = vdwg.mxu0
  %v898 = vtanh.pop %v895
  %v899 = vsub.f32 1.0, %v819
  %v900 = vmul.f32 %v899, %v735
  %v901 = vmul.f32 %v819, %v898
  %v902 = vadd.f32 %v900, %v901
  %s903 = scalar_lea.vmem %s4, 32
  %904 = vst [vmem:[%s903] sm:$0xff] %v902
  %s905 = scalar_lea.vmem %s0, 120
  %v906 = vld [vmem:[%s905] sm:$0xff]
  %v907 = vld [vmem:[%s905 + $0x8] sm:$0xff]
  %v908 = vld [vmem:[%s905 + $0x10] sm:$0xff]
  %909 = vmatprep.subr.mxu0 %v24
  %910 = vmatpush1.msra.mxu0 %v23
  %911 = vmatprep.subr.mxu0 %v26
  %912 = vmatpush1.msra.mxu0 %v25
  %913 = vmatprep.subr.mxu0 %v28
  %914 = vmatpush1.msra.mxu0 %v27
  %915 = vmatprep.subr.mxu0 %v30
  %916 = vmatpush1.msra.mxu0 %v29
  %917 = vmatprep.subr.mxu0 %v32
  %918 = vmatpush1.msra.mxu0 %v31
  %919 = vmatprep.subr.mxu0 %v34
  %920 = vmatpush1.msra.mxu0 %v33
  %921 = vmatprep.subr.mxu0 %v36
  %922 = vmatpush1.msra.mxu0 %v35
  %923 = vmatprep.subr.mxu0 %v38
  %924 = vmatpush1.msra.mxu0 %v37
  %925 = vmatprep.subr.mxu0 %v40
  %926 = vmatpush1.msra.mxu0 %v39
  %927 = vmatprep.subr.mxu0 %v42
  %928 = vmatpush1.msra.mxu0 %v41
  %929 = vmatprep.subr.mxu0 %v44
  %930 = vmatpush1.msra.mxu0 %v43
  %931 = vmatprep.subr.mxu0 %v46
  %932 = vmatpush1.msra.mxu0 %v45
  %933 = vmatprep.subr.mxu0 %v48
  %934 = vmatpush1.msra.mxu0 %v47
  %935 = vmatprep.subr.mxu0 %v50
  %936 = vmatpush1.msra.mxu0 %v49
  %937 = vmatprep.subr.mxu0 %v52
  %938 = vmatpush1.msra.mxu0 %v51
  %939 = vmatprep.subr.mxu0 %v54
  %940 = vmatpush1.msra.mxu0 %v53
  %941 = vmatprep.subr.mxu0 0.0
  %942 = vmatpush1.msra.mxu0 0.0
  %943 = vmatprep.subr.mxu0 0.0
  %944 = vmatpush1.msra.mxu0 0.0
  %945 = vmatprep.subr.mxu0 0.0
  %946 = vmatpush1.msra.mxu0 0.0
  %947 = vmatprep.subr.mxu0 0.0
  %948 = vmatpush1.msra.mxu0 0.0
  %949 = vmatprep.subr.mxu0 0.0
  %950 = vmatpush1.msra.mxu0 0.0
  %951 = vmatprep.subr.mxu0 0.0
  %952 = vmatpush1.msra.mxu0 0.0
  %953 = vmatprep.subr.mxu0 0.0
  %954 = vmatpush1.msra.mxu0 0.0
  %955 = vmatprep.subr.mxu0 0.0
  %956 = vmatpush1.msra.mxu0 0.0
  %957 = vmatprep.subr.mxu0 0.0
  %958 = vmatpush1.msra.mxu0 0.0
  %959 = vmatprep.subr.mxu0 0.0
  %960 = vmatpush1.msra.mxu0 0.0
  %961 = vmatprep.subr.mxu0 0.0
  %962 = vmatpush1.msra.mxu0 0.0
  %963 = vmatprep.subr.mxu0 0.0
  %964 = vmatpush1.msra.mxu0 0.0
  %965 = vmatprep.subr.mxu0 0.0
  %966 = vmatpush1.msra.mxu0 0.0
  %967 = vmatprep.subr.mxu0 0.0
  %968 = vmatpush1.msra.mxu0 0.0
  %969 = vmatprep.subr.mxu0 0.0
  %970 = vmatpush1.msra.mxu0 0.0
  %971 = vmatprep.subr.mxu0 0.0
  %972 = vmatpush1.msra.mxu0 0.0
  %973 = vmatprep.mubr.f32.mxu0 0.0
  %974 = vmatmul.mubr.f32.gmra.mrb[0].mxu0 %v902
  %v975 = vpop.f32.mrb[0].mxu0
  %v976 = vadd.f32 0.0, %v975
  %v977 = vpop.f32.mrb[0].mxu0
  %v978 = vadd.f32 0.0, %v977
  %979 = vdwg.mxu0
  %v980 = vadd.f32 %v976, %v906
  %v981 = vxor.u32 %v980, 2147483648
  %v982 = vmul.f32 %v981, 1.442695
  %v983 = vpow.pop %v982
  %v984 = vadd.f32 %v983, 1.0
  %v985 = vrcp.pop %v984
  %v986 = vmul.f32 1.0, %v985
  %v987 = vadd.f32 %v978, %v907
  %v988 = vxor.u32 %v987, 2147483648
  %v989 = vmul.f32 %v988, 1.442695
  %v990 = vpow.pop %v989
  %v991 = vadd.f32 %v990, 1.0
  %v992 = vrcp.pop %v991
  %v993 = vmul.f32 1.0, %v992
  %v994 = vmul.f32 %v993, %v902
  %995 = vmatprep.subr.mxu0 0.0
  %996 = vmatpush1.msra.mxu0 %v55
  %997 = vmatprep.subr.mxu0 0.0
  %998 = vmatpush1.msra.mxu0 %v56
  %999 = vmatprep.subr.mxu0 0.0
  %1000 = vmatpush1.msra.mxu0 %v57
  %1001 = vmatprep.subr.mxu0 0.0
  %1002 = vmatpush1.msra.mxu0 %v58
  %1003 = vmatprep.subr.mxu0 0.0
  %1004 = vmatpush1.msra.mxu0 %v59
  %1005 = vmatprep.subr.mxu0 0.0
  %1006 = vmatpush1.msra.mxu0 %v60
  %1007 = vmatprep.subr.mxu0 0.0
  %1008 = vmatpush1.msra.mxu0 %v61
  %1009 = vmatprep.subr.mxu0 0.0
  %1010 = vmatpush1.msra.mxu0 %v62
  %1011 = vmatprep.subr.mxu0 0.0
  %1012 = vmatpush1.msra.mxu0 %v63
  %1013 = vmatprep.subr.mxu0 0.0
  %1014 = vmatpush1.msra.mxu0 %v64
  %1015 = vmatprep.subr.mxu0 0.0
  %1016 = vmatpush1.msra.mxu0 %v65
  %1017 = vmatprep.subr.mxu0 0.0
  %1018 = vmatpush1.msra.mxu0 %v66
  %1019 = vmatprep.subr.mxu0 0.0
  %1020 = vmatpush1.msra.mxu0 %v67
  %1021 = vmatprep.subr.mxu0 0.0
  %1022 = vmatpush1.msra.mxu0 %v68
  %1023 = vmatprep.subr.mxu0 0.0
  %1024 = vmatpush1.msra.mxu0 %v69
  %1025 = vmatprep.subr.mxu0 0.0
  %1026 = vmatpush1.msra.mxu0 %v70
  %1027 = vmatprep.subr.mxu0 0.0
  %1028 = vmatpush1.msra.mxu0 0.0
  %1029 = vmatprep.subr.mxu0 0.0
  %1030 = vmatpush1.msra.mxu0 0.0
  %1031 = vmatprep.subr.mxu0 0.0
  %1032 = vmatpush1.msra.mxu0 0.0
  %1033 = vmatprep.subr.mxu0 0.0
  %1034 = vmatpush1.msra.mxu0 0.0
  %1035 = vmatprep.subr.mxu0 0.0
  %1036 = vmatpush1.msra.mxu0 0.0
  %1037 = vmatprep.subr.mxu0 0.0
  %1038 = vmatpush1.msra.mxu0 0.0
  %1039 = vmatprep.subr.mxu0 0.0
  %1040 = vmatpush1.msra.mxu0 0.0
  %1041 = vmatprep.subr.mxu0 0.0
  %1042 = vmatpush1.msra.mxu0 0.0
  %1043 = vmatprep.subr.mxu0 0.0
  %1044 = vmatpush1.msra.mxu0 0.0
  %1045 = vmatprep.subr.mxu0 0.0
  %1046 = vmatpush1.msra.mxu0 0.0
  %1047 = vmatprep.subr.mxu0 0.0
  %1048 = vmatpush1.msra.mxu0 0.0
  %1049 = vmatprep.subr.mxu0 0.0
  %1050 = vmatpush1.msra.mxu0 0.0
  %1051 = vmatprep.subr.mxu0 0.0
  %1052 = vmatpush1.msra.mxu0 0.0
  %1053 = vmatprep.subr.mxu0 0.0
  %1054 = vmatpush1.msra.mxu0 0.0
  %1055 = vmatprep.subr.mxu0 0.0
  %1056 = vmatpush1.msra.mxu0 0.0
  %1057 = vmatprep.subr.mxu0 0.0
  %1058 = vmatpush1.msra.mxu0 0.0
  %1059 = vmatprep.mubr.f32.mxu0 0.0
  %1060 = vmatmul.mubr.f32.gmra.mrb[0].mxu0 %v994
  %v1061 = vpop.f32.mrb[0].mxu0
  %v1062 = vadd.f32 %v908, %v1061
  %v1063 = vpop.f32.mrb[0].mxu0
  %1064 = vdwg.mxu0
  %v1065 = vtanh.pop %v1062
  %v1066 = vsub.f32 1.0, %v986
  %v1067 = vmul.f32 %v1066, %v902
  %v1068 = vmul.f32 %v986, %v1065
  %v1069 = vadd.f32 %v1067, %v1068
  %s1070 = scalar_lea.vmem %s4, 40
  %1071 = vst [vmem:[%s1070] sm:$0xff] %v1069
  %s1072 = scalar_lea.vmem %s0, 144
  %v1073 = vld [vmem:[%s1072] sm:$0xff]
  %v1074 = vld [vmem:[%s1072 + $0x8] sm:$0xff]
  %v1075 = vld [vmem:[%s1072 + $0x10] sm:$0xff]
  %1076 = vmatprep.subr.mxu0 %v24
  %1077 = vmatpush1.msra.mxu0 %v23
  %1078 = vmatprep.subr.mxu0 %v26
  %1079 = vmatpush1.msra.mxu0 %v25
  %1080 = vmatprep.subr.mxu0 %v28
  %1081 = vmatpush1.msra.mxu0 %v27
  %1082 = vmatprep.subr.mxu0 %v30
  %1083 = vmatpush1.msra.mxu0 %v29
  %1084 = vmatprep.subr.mxu0 %v32
  %1085 = vmatpush1.msra.mxu0 %v31
  %1086 = vmatprep.subr.mxu0 %v34
  %1087 = vmatpush1.msra.mxu0 %v33
  %1088 = vmatprep.subr.mxu0 %v36
  %1089 = vmatpush1.msra.mxu0 %v35
  %1090 = vmatprep.subr.mxu0 %v38
  %1091 = vmatpush1.msra.mxu0 %v37
  %1092 = vmatprep.subr.mxu0 %v40
  %1093 = vmatpush1.msra.mxu0 %v39
  %1094 = vmatprep.subr.mxu0 %v42
  %1095 = vmatpush1.msra.mxu0 %v41
  %1096 = vmatprep.subr.mxu0 %v44
  %1097 = vmatpush1.msra.mxu0 %v43
  %1098 = vmatprep.subr.mxu0 %v46
  %1099 = vmatpush1.msra.mxu0 %v45
  %1100 = vmatprep.subr.mxu0 %v48
  %1101 = vmatpush1.msra.mxu0 %v47
  %1102 = vmatprep.subr.mxu0 %v50
  %1103 = vmatpush1.msra.mxu0 %v49
  %1104 = vmatprep.subr.mxu0 %v52
  %1105 = vmatpush1.msra.mxu0 %v51
  %1106 = vmatprep.subr.mxu0 %v54
  %1107 = vmatpush1.msra.mxu0 %v53
  %1108 = vmatprep.subr.mxu0 0.0
  %1109 = vmatpush1.msra.mxu0 0.0
  %1110 = vmatprep.subr.mxu0 0.0
  %1111 = vmatpush1.msra.mxu0 0.0
  %1112 = vmatprep.subr.mxu0 0.0
  %1113 = vmatpush1.msra.mxu0 0.0
  %1114 = vmatprep.subr.mxu0 0.0
  %1115 = vmatpush1.msra.mxu0 0.0
  %1116 = vmatprep.subr.mxu0 0.0
  %1117 = vmatpush1.msra.mxu0 0.0
  %1118 = vmatprep.subr.mxu0 0.0
  %1119 = vmatpush1.msra.mxu0 0.0
  %1120 = vmatprep.subr.mxu0 0.0
  %1121 = vmatpush1.msra.mxu0 0.0
  %1122 = vmatprep.subr.mxu0 0.0
  %1123 = vmatpush1.msra.mxu0 0.0
  %1124 = vmatprep.subr.mxu0 0.0
  %1125 = vmatpush1.msra.mxu0 0.0
  %1126 = vmatprep.subr.mxu0 0.0
  %1127 = vmatpush1.msra.mxu0 0.0
  %1128 = vmatprep.subr.mxu0 0.0
  %1129 = vmatpush1.msra.mxu0 0.0
  %1130 = vmatprep.subr.mxu0 0.0
  %1131 = vmatpush1.msra.mxu0 0.0
  %1132 = vmatprep.subr.mxu0 0.0
  %1133 = vmatpush1.msra.mxu0 0.0
  %1134 = vmatprep.subr.mxu0 0.0
  %1135 = vmatpush1.msra.mxu0 0.0
  %1136 = vmatprep.subr.mxu0 0.0
  %1137 = vmatpush1.msra.mxu0 0.0
  %1138 = vmatprep.subr.mxu0 0.0
  %1139 = vmatpush1.msra.mxu0 0.0
  %1140 = vmatprep.mubr.f32.mxu0 0.0
  %1141 = vmatmul.mubr.f32.gmra.mrb[0].mxu0 %v1069
  %v1142 = vpop.f32.mrb[0].mxu0
  %v1143 = vadd.f32 0.0, %v1142
  %v1144 = vpop.f32.mrb[0].mxu0
  %v1145 = vadd.f32 0.0, %v1144
  %1146 = vdwg.mxu0
  %v1147 = vadd.f32 %v1143, %v1073
  %v1148 = vxor.u32 %v1147, 2147483648
  %v1149 = vmul.f32 %v1148, 1.442695
  %v1150 = vpow.pop %v1149
  %v1151 = vadd.f32 %v1150, 1.0
  %v1152 = vrcp.pop %v1151
  %v1153 = vmul.f32 1.0, %v1152
  %v1154 = vadd.f32 %v1145, %v1074
  %v1155 = vxor.u32 %v1154, 2147483648
  %v1156 = vmul.f32 %v1155, 1.442695
  %v1157 = vpow.pop %v1156
  %v1158 = vadd.f32 %v1157, 1.0
  %v1159 = vrcp.pop %v1158
  %v1160 = vmul.f32 1.0, %v1159
  %v1161 = vmul.f32 %v1160, %v1069
  %1162 = vmatprep.subr.mxu0 0.0
  %1163 = vmatpush1.msra.mxu0 %v55
  %1164 = vmatprep.subr.mxu0 0.0
  %1165 = vmatpush1.msra.mxu0 %v56
  %1166 = vmatprep.subr.mxu0 0.0
  %1167 = vmatpush1.msra.mxu0 %v57
  %1168 = vmatprep.subr.mxu0 0.0
  %1169 = vmatpush1.msra.mxu0 %v58
  %1170 = vmatprep.subr.mxu0 0.0
  %1171 = vmatpush1.msra.mxu0 %v59
  %1172 = vmatprep.subr.mxu0 0.0
  %1173 = vmatpush1.msra.mxu0 %v60
  %1174 = vmatprep.subr.mxu0 0.0
  %1175 = vmatpush1.msra.mxu0 %v61
  %1176 = vmatprep.subr.mxu0 0.0
  %1177 = vmatpush1.msra.mxu0 %v62
  %1178 = vmatprep.subr.mxu0 0.0
  %1179 = vmatpush1.msra.mxu0 %v63
  %1180 = vmatprep.subr.mxu0 0.0
  %1181 = vmatpush1.msra.mxu0 %v64
  %1182 = vmatprep.subr.mxu0 0.0
  %1183 = vmatpush1.msra.mxu0 %v65
  %1184 = vmatprep.subr.mxu0 0.0
  %1185 = vmatpush1.msra.mxu0 %v66
  %1186 = vmatprep.subr.mxu0 0.0
  %1187 = vmatpush1.msra.mxu0 %v67
  %1188 = vmatprep.subr.mxu0 0.0
  %1189 = vmatpush1.msra.mxu0 %v68
  %1190 = vmatprep.subr.mxu0 0.0
  %1191 = vmatpush1.msra.mxu0 %v69
  %1192 = vmatprep.subr.mxu0 0.0
  %1193 = vmatpush1.msra.mxu0 %v70
  %1194 = vmatprep.subr.mxu0 0.0
  %1195 = vmatpush1.msra.mxu0 0.0
  %1196 = vmatprep.subr.mxu0 0.0
  %1197 = vmatpush1.msra.mxu0 0.0
  %1198 = vmatprep.subr.mxu0 0.0
  %1199 = vmatpush1.msra.mxu0 0.0
  %1200 = vmatprep.subr.mxu0 0.0
  %1201 = vmatpush1.msra.mxu0 0.0
  %1202 = vmatprep.subr.mxu0 0.0
  %1203 = vmatpush1.msra.mxu0 0.0
  %1204 = vmatprep.subr.mxu0 0.0
  %1205 = vmatpush1.msra.mxu0 0.0
  %1206 = vmatprep.subr.mxu0 0.0
  %1207 = vmatpush1.msra.mxu0 0.0
  %1208 = vmatprep.subr.mxu0 0.0
  %1209 = vmatpush1.msra.mxu0 0.0
  %1210 = vmatprep.subr.mxu0 0.0
  %1211 = vmatpush1.msra.mxu0 0.0
  %1212 = vmatprep.subr.mxu0 0.0
  %1213 = vmatpush1.msra.mxu0 0.0
  %1214 = vmatprep.subr.mxu0 0.0
  %1215 = vmatpush1.msra.mxu0 0.0
  %1216 = vmatprep.subr.mxu0 0.0
  %1217 = vmatpush1.msra.mxu0 0.0
  %1218 = vmatprep.subr.mxu0 0.0
  %1219 = vmatpush1.msra.mxu0 0.0
  %1220 = vmatprep.subr.mxu0 0.0
  %1221 = vmatpush1.msra.mxu0 0.0
  %1222 = vmatprep.subr.mxu0 0.0
  %1223 = vmatpush1.msra.mxu0 0.0
  %1224 = vmatprep.subr.mxu0 0.0
  %1225 = vmatpush1.msra.mxu0 0.0
  %1226 = vmatprep.mubr.f32.mxu0 0.0
  %1227 = vmatmul.mubr.f32.gmra.mrb[0].mxu0 %v1161
  %v1228 = vpop.f32.mrb[0].mxu0
  %v1229 = vadd.f32 %v1075, %v1228
  %v1230 = vpop.f32.mrb[0].mxu0
  %1231 = vdwg.mxu0
  %v1232 = vtanh.pop %v1229
  %v1233 = vsub.f32 1.0, %v1153
  %v1234 = vmul.f32 %v1233, %v1069
  %v1235 = vmul.f32 %v1153, %v1232
  %v1236 = vadd.f32 %v1234, %v1235
  %s1237 = scalar_lea.vmem %s4, 48
  %1238 = vst [vmem:[%s1237] sm:$0xff] %v1236
  %s1239 = scalar_lea.vmem %s0, 168
  %v1240 = vld [vmem:[%s1239] sm:$0xff]
  %v1241 = vld [vmem:[%s1239 + $0x8] sm:$0xff]
  %v1242 = vld [vmem:[%s1239 + $0x10] sm:$0xff]
  %1243 = vmatprep.subr.mxu0 %v24
  %1244 = vmatpush1.msra.mxu0 %v23
  %1245 = vmatprep.subr.mxu0 %v26
  %1246 = vmatpush1.msra.mxu0 %v25
  %1247 = vmatprep.subr.mxu0 %v28
  %1248 = vmatpush1.msra.mxu0 %v27
  %1249 = vmatprep.subr.mxu0 %v30
  %1250 = vmatpush1.msra.mxu0 %v29
  %1251 = vmatprep.subr.mxu0 %v32
  %1252 = vmatpush1.msra.mxu0 %v31
  %1253 = vmatprep.subr.mxu0 %v34
  %1254 = vmatpush1.msra.mxu0 %v33
  %1255 = vmatprep.subr.mxu0 %v36
  %1256 = vmatpush1.msra.mxu0 %v35
  %1257 = vmatprep.subr.mxu0 %v38
  %1258 = vmatpush1.msra.mxu0 %v37
  %1259 = vmatprep.subr.mxu0 %v40
  %1260 = vmatpush1.msra.mxu0 %v39
  %1261 = vmatprep.subr.mxu0 %v42
  %1262 = vmatpush1.msra.mxu0 %v41
  %1263 = vmatprep.subr.mxu0 %v44
  %1264 = vmatpush1.msra.mxu0 %v43
  %1265 = vmatprep.subr.mxu0 %v46
  %1266 = vmatpush1.msra.mxu0 %v45
  %1267 = vmatprep.subr.mxu0 %v48
  %1268 = vmatpush1.msra.mxu0 %v47
  %1269 = vmatprep.subr.mxu0 %v50
  %1270 = vmatpush1.msra.mxu0 %v49
  %1271 = vmatprep.subr.mxu0 %v52
  %1272 = vmatpush1.msra.mxu0 %v51
  %1273 = vmatprep.subr.mxu0 %v54
  %1274 = vmatpush1.msra.mxu0 %v53
  %1275 = vmatprep.subr.mxu0 0.0
  %1276 = vmatpush1.msra.mxu0 0.0
  %1277 = vmatprep.subr.mxu0 0.0
  %1278 = vmatpush1.msra.mxu0 0.0
  %1279 = vmatprep.subr.mxu0 0.0
  %1280 = vmatpush1.msra.mxu0 0.0
  %1281 = vmatprep.subr.mxu0 0.0
  %1282 = vmatpush1.msra.mxu0 0.0
  %1283 = vmatprep.subr.mxu0 0.0
  %1284 = vmatpush1.msra.mxu0 0.0
  %1285 = vmatprep.subr.mxu0 0.0
  %1286 = vmatpush1.msra.mxu0 0.0
  %1287 = vmatprep.subr.mxu0 0.0
  %1288 = vmatpush1.msra.mxu0 0.0
  %1289 = vmatprep.subr.mxu0 0.0
  %1290 = vmatpush1.msra.mxu0 0.0
  %1291 = vmatprep.subr.mxu0 0.0
  %1292 = vmatpush1.msra.mxu0 0.0
  %1293 = vmatprep.subr.mxu0 0.0
  %1294 = vmatpush1.msra.mxu0 0.0
  %1295 = vmatprep.subr.mxu0 0.0
  %1296 = vmatpush1.msra.mxu0 0.0
  %1297 = vmatprep.subr.mxu0 0.0
  %1298 = vmatpush1.msra.mxu0 0.0
  %1299 = vmatprep.subr.mxu0 0.0
  %1300 = vmatpush1.msra.mxu0 0.0
  %1301 = vmatprep.subr.mxu0 0.0
  %1302 = vmatpush1.msra.mxu0 0.0
  %1303 = vmatprep.subr.mxu0 0.0
  %1304 = vmatpush1.msra.mxu0 0.0
  %1305 = vmatprep.subr.mxu0 0.0
  %1306 = vmatpush1.msra.mxu0 0.0
  %1307 = vmatprep.mubr.f32.mxu0 0.0
  %1308 = vmatmul.mubr.f32.gmra.mrb[0].mxu0 %v1236
  %v1309 = vpop.f32.mrb[0].mxu0
  %v1310 = vadd.f32 0.0, %v1309
  %v1311 = vpop.f32.mrb[0].mxu0
  %v1312 = vadd.f32 0.0, %v1311
  %1313 = vdwg.mxu0
  %v1314 = vadd.f32 %v1310, %v1240
  %v1315 = vxor.u32 %v1314, 2147483648
  %v1316 = vmul.f32 %v1315, 1.442695
  %v1317 = vpow.pop %v1316
  %v1318 = vadd.f32 %v1317, 1.0
  %v1319 = vrcp.pop %v1318
  %v1320 = vmul.f32 1.0, %v1319
  %v1321 = vadd.f32 %v1312, %v1241
  %v1322 = vxor.u32 %v1321, 2147483648
  %v1323 = vmul.f32 %v1322, 1.442695
  %v1324 = vpow.pop %v1323
  %v1325 = vadd.f32 %v1324, 1.0
  %v1326 = vrcp.pop %v1325
  %v1327 = vmul.f32 1.0, %v1326
  %v1328 = vmul.f32 %v1327, %v1236
  %1329 = vmatprep.subr.mxu0 0.0
  %1330 = vmatpush1.msra.mxu0 %v55
  %1331 = vmatprep.subr.mxu0 0.0
  %1332 = vmatpush1.msra.mxu0 %v56
  %1333 = vmatprep.subr.mxu0 0.0
  %1334 = vmatpush1.msra.mxu0 %v57
  %1335 = vmatprep.subr.mxu0 0.0
  %1336 = vmatpush1.msra.mxu0 %v58
  %1337 = vmatprep.subr.mxu0 0.0
  %1338 = vmatpush1.msra.mxu0 %v59
  %1339 = vmatprep.subr.mxu0 0.0
  %1340 = vmatpush1.msra.mxu0 %v60
  %1341 = vmatprep.subr.mxu0 0.0
  %1342 = vmatpush1.msra.mxu0 %v61
  %1343 = vmatprep.subr.mxu0 0.0
  %1344 = vmatpush1.msra.mxu0 %v62
  %1345 = vmatprep.subr.mxu0 0.0
  %1346 = vmatpush1.msra.mxu0 %v63
  %1347 = vmatprep.subr.mxu0 0.0
  %1348 = vmatpush1.msra.mxu0 %v64
  %1349 = vmatprep.subr.mxu0 0.0
  %1350 = vmatpush1.msra.mxu0 %v65
  %1351 = vmatprep.subr.mxu0 0.0
  %1352 = vmatpush1.msra.mxu0 %v66
  %1353 = vmatprep.subr.mxu0 0.0
  %1354 = vmatpush1.msra.mxu0 %v67
  %1355 = vmatprep.subr.mxu0 0.0
  %1356 = vmatpush1.msra.mxu0 %v68
  %1357 = vmatprep.subr.mxu0 0.0
  %1358 = vmatpush1.msra.mxu0 %v69
  %1359 = vmatprep.subr.mxu0 0.0
  %1360 = vmatpush1.msra.mxu0 %v70
  %1361 = vmatprep.subr.mxu0 0.0
  %1362 = vmatpush1.msra.mxu0 0.0
  %1363 = vmatprep.subr.mxu0 0.0
  %1364 = vmatpush1.msra.mxu0 0.0
  %1365 = vmatprep.subr.mxu0 0.0
  %1366 = vmatpush1.msra.mxu0 0.0
  %1367 = vmatprep.subr.mxu0 0.0
  %1368 = vmatpush1.msra.mxu0 0.0
  %1369 = vmatprep.subr.mxu0 0.0
  %1370 = vmatpush1.msra.mxu0 0.0
  %1371 = vmatprep.subr.mxu0 0.0
  %1372 = vmatpush1.msra.mxu0 0.0
  %1373 = vmatprep.subr.mxu0 0.0
  %1374 = vmatpush1.msra.mxu0 0.0
  %1375 = vmatprep.subr.mxu0 0.0
  %1376 = vmatpush1.msra.mxu0 0.0
  %1377 = vmatprep.subr.mxu0 0.0
  %1378 = vmatpush1.msra.mxu0 0.0
  %1379 = vmatprep.subr.mxu0 0.0
  %1380 = vmatpush1.msra.mxu0 0.0
  %1381 = vmatprep.subr.mxu0 0.0
  %1382 = vmatpush1.msra.mxu0 0.0
  %1383 = vmatprep.subr.mxu0 0.0
  %1384 = vmatpush1.msra.mxu0 0.0
  %1385 = vmatprep.subr.mxu0 0.0
  %1386 = vmatpush1.msra.mxu0 0.0
  %1387 = vmatprep.subr.mxu0 0.0
  %1388 = vmatpush1.msra.mxu0 0.0
  %1389 = vmatprep.subr.mxu0 0.0
  %1390 = vmatpush1.msra.mxu0 0.0
  %1391 = vmatprep.subr.mxu0 0.0
  %1392 = vmatpush1.msra.mxu0 0.0
  %1393 = vmatprep.mubr.f32.mxu0 0.0
  %1394 = vmatmul.mubr.f32.gmra.mrb[0].mxu0 %v1328
  %v1395 = vpop.f32.mrb[0].mxu0
  %v1396 = vadd.f32 %v1242, %v1395
  %v1397 = vpop.f32.mrb[0].mxu0
  %1398 = vdwg.mxu0
  %v1399 = vtanh.pop %v1396
  %v1400 = vsub.f32 1.0, %v1320
  %v1401 = vmul.f32 %v1400, %v1236
  %v1402 = vmul.f32 %v1320, %v1399
  %v1403 = vadd.f32 %v1401, %v1402
  %s1404 = scalar_lea.vmem %s4, 56
  %1405 = vst [vmem:[%s1404] sm:$0xff] %v1403
  %1406 = vst [vmem:[#allocation2] sm:$0xff] %v1403
  // Predicated region
  $region22: #{gru_forward.1} parent=0 // pred_check
    _
  $region23: #{gru_forward.1} parent=0 // pred_check_branch
    %1408 = sbr.rel (0) target = $region25
  $region24: #{gru_forward.1} parent=0 // pred_region
    _
  $region25: #{gru_forward.1} parent=0 // pred_fallthru
    _
  // Predicated region
  $region26: #{gru_forward.1} parent=0 // pred_check
    _
  $region27: #{gru_forward.1} parent=0 // pred_check_branch
    %1410 = sbr.rel (0) target = $region29
  $region28: #{gru_forward.1} parent=0 // pred_region
    _
  $region29: #{gru_forward.1} parent=0 // pred_fallthru
    _

</llo_original>
